<compile_context>
chip_gen: v6e
topology: v6e:2x2x1
jax: 0.10.0
libtpu: 0.0.40
codegen_flags: <defaults>
</compile_context>

<pallas_src>
import functools

import jax
import jax.numpy as jnp
import numpy as np
from jax import lax
from jax.experimental import pallas as pl
from jax.experimental.pallas import tpu as pltpu

LANE = 128
SUBLANE = 8
# Row-tile target: double-buffered (im2col tile + raw-output tiles + weights +
# stat accumulators) stays at a few MiB -> safe on v7x (64 MiB VMEM); raise
# toward 1024-2048 on v5e/v6e if desired.
DEFAULT_TILE_ROWS = 512
VMEM_LIMIT_BYTES = 32 * 1024 * 1024
# Matmul operand dtype.  jnp.bfloat16 halves activation/weight HBM traffic and
# runs the MXU at native rate; kept f32 here so the self-test's tight 1e-4
# tolerance against the f32 reference holds.  Accumulation is f32 either way.
MATMUL_DTYPE = jnp.float32


# ----------------------------- small helpers -------------------------------
def _round_up(x, m):
    return (x + m - 1) // m * m


def _pad_axis(a, axis, new_size, value=0.0):
    if a.shape[axis] == new_size:
        return a
    pad = [(0, 0)] * a.ndim
    pad[axis] = (0, new_size - a.shape[axis])
    return jnp.pad(a, pad, constant_values=value)


def _pad_rows(a, tile_rows):
    return _pad_axis(a, 0, _round_up(a.shape[0], tile_rows))


def _pick_tile_rows(rows, target=DEFAULT_TILE_ROWS):
    return min(target, _round_up(rows, SUBLANE))


def _im2col(x_nlc, k, stride, padding):
    """x_nlc: (N, L, Cp) -> ((N*L_out, k*Cp) f32, L_out).

    The K shifted, stride-decimated taps are stacked along the channel (lane)
    axis so the conv is a single (rows, K*Cp) x (K*Cp, Cout) matmul in the
    kernel: no strided VMEM reads, no per-tap accumulation adds.
    # TODO(synk): build this slab inside the kernel from halo'd input tiles
    # (manual DMA) to avoid the K-times activation write in HBM.
    """
    n, l, c = x_nlc.shape
    l_out = (l + 2 * padding - k) // stride + 1
    xp = jnp.pad(x_nlc, ((0, 0), (padding, padding), (0, 0)))
    taps = []
    for kk in range(k):
        lim = kk + (l_out - 1) * stride + 1
        taps.append(lax.slice(xp, (0, kk, 0), (n, lim, c), (1, stride, 1)))
    xcol = jnp.concatenate(taps, axis=-1)
    return xcol.reshape(n * l_out, k * c), l_out


def _conv_weight(w_oik, cp_in, cp_out):
    """Torch (Cout, Cin, K) -> (K*Cp_in, Cp_out), zero padded, k-major rows."""
    _, _, k = w_oik.shape
    w = jnp.transpose(w_oik, (2, 1, 0)).astype(jnp.float32)   # (K, Cin, Cout)
    w = _pad_axis(_pad_axis(w, 1, cp_in), 2, cp_out)
    return w.reshape(k * cp_in, cp_out)


def _bn_param(v, cp, fill):
    return _pad_axis(v.astype(jnp.float32).reshape(1, -1), 1, cp, fill)


def _bn_scale_shift(st, g, b, eps):
    """Fold batch (mean, var) + affine (gamma, beta) into y*scale + shift."""
    scale = g * lax.rsqrt(st[1:2, :] + eps)
    shift = b - st[0:1, :] * scale
    return scale, shift


def _row_spec(tile_rows, cols):
    return pl.BlockSpec((tile_rows, cols), lambda t: (t, 0))


def _full_spec(shape):
    return pl.BlockSpec(shape, lambda t: (0, 0))


# ------------------------------- kernels -----------------------------------
def _merge_tile_stats(y, mean_ref, m2_ref, rows_true, tile_rows):
    """Chan/Welford merge of this tile's per-channel (count, mean, M2) into
    the running accumulators.  Rows >= rows_true (zero row padding) are
    masked so BatchNorm statistics stay exactly global over (N, L)."""
    t = pl.program_id(0)
    row0 = t * tile_rows
    ridx = row0 + lax.broadcasted_iota(jnp.int32, (y.shape[0], 1), 0)
    mask = (ridx < rows_true).astype(jnp.float32)                  # (TR, 1)
    cnt_b = jnp.minimum(rows_true - row0, tile_rows).astype(jnp.float32)
    cnt_a = jnp.minimum(row0, rows_true).astype(jnp.float32)

    sum_b = jnp.sum(y * mask, axis=0, keepdims=True)               # (1, C)
    m_b = sum_b * (1.0 / cnt_b)
    d = (y - m_b) * mask
    m2_b = jnp.sum(d * d, axis=0, keepdims=True)

    tot = cnt_a + cnt_b
    delta = m_b - mean_ref[...]
    mean_ref[...] = mean_ref[...] + delta * (cnt_b / tot)
    m2_ref[...] = m2_ref[...] + m2_b + delta * delta * (cnt_a * cnt_b / tot)


def _conv_stats_kernel(xcol_ref, w_ref, y_ref, st_ref, mean_ref, m2_ref, *,
                       rows_true, tile_rows):
    """Pass 1: conv (single deep-contraction matmul) + global BN stats."""
    t = pl.program_id(0)

    @pl.when(t == 0)
    def _():
        mean_ref[...] = jnp.zeros_like(mean_ref)
        m2_ref[...] = jnp.zeros_like(m2_ref)

    x = xcol_ref[...].astype(MATMUL_DTYPE)
    y = jnp.dot(x, w_ref[...].astype(MATMUL_DTYPE),
                preferred_element_type=jnp.float32)
    y_ref[...] = y
    _merge_tile_stats(y, mean_ref, m2_ref, rows_true, tile_rows)

    @pl.when(t == pl.num_programs(0) - 1)
    def _():
        st_ref[0:1, :] = mean_ref[...]
        st_ref[1:2, :] = m2_ref[...] * (1.0 / rows_true)   # biased variance


def _conv_shortcut_stats_kernel(xcol_ref, w_ref, ws_ref,
                                y_ref, sc_ref, st_ref, sts_ref,
                                mean_ref, m2_ref, means_ref, m2s_ref, *,
                                rows_true, tile_rows, cp_in, sc_tap):
    """Pass 1 for conv1 fused with the 1x1 stride-s shortcut conv + both BNs'
    global statistics.  x is read from HBM once for both convolutions."""
    t = pl.program_id(0)

    @pl.when(t == 0)
    def _():
        for r in (mean_ref, m2_ref, means_ref, m2s_ref):
            r[...] = jnp.zeros_like(r)

    x = xcol_ref[...].astype(MATMUL_DTYPE)
    y = jnp.dot(x, w_ref[...].astype(MATMUL_DTYPE),
                preferred_element_type=jnp.float32)
    y_ref[...] = y
    _merge_tile_stats(y, mean_ref, m2_ref, rows_true, tile_rows)

    # Shortcut input == tap `sc_tap` (spatial offset 0) of the conv1 slab.
    xs = x[:, sc_tap * cp_in:(sc_tap + 1) * cp_in]
    ysc = jnp.dot(xs, ws_ref[...].astype(MATMUL_DTYPE),
                  preferred_element_type=jnp.float32)
    sc_ref[...] = ysc
    _merge_tile_stats(ysc, means_ref, m2s_ref, rows_true, tile_rows)

    @pl.when(t == pl.num_programs(0) - 1)
    def _():
        inv_n = 1.0 / rows_true
        st_ref[0:1, :] = mean_ref[...]
        st_ref[1:2, :] = m2_ref[...] * inv_n
        sts_ref[0:1, :] = means_ref[...]
        sts_ref[1:2, :] = m2s_ref[...] * inv_n


def _bnrelu_conv_stats_kernel(xcol_ref, mask_ref, scale_ref, shift_ref, w_ref,
                              y_ref, st_ref, mean_ref, m2_ref, *,
                              rows_true, tile_rows, cp):
    """conv1-BN + ReLU fused into conv2's pass 1.

    xcol_ref holds the im2col slab of the *raw* conv1 output.  Each tap gets
    the per-channel affine (scale/shift, tiled K times along lanes) + ReLU on
    the VPU, then the left/right taps are zeroed where they correspond to
    conv2's spatial zero padding (mask lanes), and the 3 tap matmuls hit the
    MXU.  Global BN2 statistics are accumulated as in the other pass-1s."""
    t = pl.program_id(0)

    @pl.when(t == 0)
    def _():
        mean_ref[...] = jnp.zeros_like(mean_ref)
        m2_ref[...] = jnp.zeros_like(m2_ref)

    z = jnp.maximum(xcol_ref[...] * scale_ref[...] + shift_ref[...], 0.0)
    ml = mask_ref[:, 0:1]          # 0.0 where tap 0 is spatial padding
    mr = mask_ref[:, 1:2]          # 0.0 where tap 2 is spatial padding

    y = jnp.zeros((z.shape[0], y_ref.shape[1]), jnp.float32)
    for kk, m in enumerate((ml, None, mr)):
        zk = z[:, kk * cp:(kk + 1) * cp]
        if m is not None:
            zk = zk * m
        wk = w_ref[kk * cp:(kk + 1) * cp, :]
        y = y + jnp.dot(zk.astype(MATMUL_DTYPE), wk.astype(MATMUL_DTYPE),
                        preferred_element_type=jnp.float32)

    y_ref[...] = y
    _merge_tile_stats(y, mean_ref, m2_ref, rows_true, tile_rows)

    @pl.when(t == pl.num_programs(0) - 1)
    def _():
        st_ref[0:1, :] = mean_ref[...]
        st_ref[1:2, :] = m2_ref[...] * (1.0 / rows_true)


def _affine_add_relu_kernel(y_ref, sc_ref, sh_ref, r_ref, o_ref):
    o_ref[...] = jnp.maximum(
        y_ref[...] * sc_ref[...] + sh_ref[...] + r_ref[...], 0.0)


def _affine2_add_relu_kernel(y_ref, sc_ref, sh_ref,
                             r_ref, scs_ref, shs_ref, o_ref):
    o_ref[...] = jnp.maximum(
        y_ref[...] * sc_ref[...] + sh_ref[...]
        + r_ref[...] * scs_ref[...] + shs_ref[...], 0.0)


# ---------------------------- pallas_call wrappers --------------------------
def conv_bn_pass1(xcol, w_col, *, rows_true, tile_rows,
                  ws_col=None, cp_in=None, sc_tap=None):
    rows_pad, kc = xcol.shape
    c_out = w_col.shape[1]
    n_tiles = rows_pad // tile_rows
    with_sc = ws_col is not None

    in_specs = [_row_spec(tile_rows, kc), _full_spec(w_col.shape)]
    operands = [xcol, w_col]
    if with_sc:
        in_specs.append(_full_spec(ws_col.shape))
        operands.append(ws_col)

    out_shapes = [jax.ShapeDtypeStruct((rows_pad, c_out), jnp.float32)]
    out_specs = [_row_spec(tile_rows, c_out)]
    if with_sc:
        out_shapes.append(jax.ShapeDtypeStruct((rows_pad, c_out), jnp.float32))
        out_specs.append(_row_spec(tile_rows, c_out))
    out_shapes.append(jax.ShapeDtypeStruct((2, c_out), jnp.float32))
    out_specs.append(_full_spec((2, c_out)))
    if with_sc:
        out_shapes.append(jax.ShapeDtypeStruct((2, c_out), jnp.float32))
        out_specs.append(_full_spec((2, c_out)))

    n_acc = 4 if with_sc else 2
    scratch = [pltpu.VMEM((1, c_out), jnp.float32) for _ in range(n_acc)]

    if with_sc:
        kernel = functools.partial(
            _conv_shortcut_stats_kernel, rows_true=rows_true,
            tile_rows=tile_rows, cp_in=cp_in, sc_tap=sc_tap)
    else:
        kernel = functools.partial(
            _conv_stats_kernel, rows_true=rows_true, tile_rows=tile_rows)

    contraction = kc + (cp_in if with_sc else 0)
    flops = int(2 * rows_pad * contraction * c_out)
    bytes_io = int(4 * (xcol.size + w_col.size
                        + (ws_col.size if with_sc else 0)
                        + sum(int(np.prod(s.shape)) for s in out_shapes)))

    return pl.pallas_call(
        kernel,
        out_shape=tuple(out_shapes),
        grid_spec=pltpu.PrefetchScalarGridSpec(
            num_scalar_prefetch=0,
            grid=(n_tiles,),
            in_specs=in_specs,
            out_specs=tuple(out_specs),
            scratch_shapes=scratch),
        compiler_params=pltpu.CompilerParams(
            dimension_semantics=("arbitrary",),   # stats reduction axis
            vmem_limit_bytes=VMEM_LIMIT_BYTES),
        cost_estimate=pl.CostEstimate(
            flops=flops, transcendentals=0, bytes_accessed=bytes_io),
    )(*operands)


def bnrelu_conv_bn_pass1(xcol, mask, scale3, shift3, w_col, *,
                         rows_true, tile_rows, cp):
    rows_pad, kc = xcol.shape
    c_out = w_col.shape[1]
    n_tiles = rows_pad // tile_rows
    kernel = functools.partial(_bnrelu_conv_stats_kernel, rows_true=rows_true,
                               tile_rows=tile_rows, cp=cp)
    flops = int(2 * rows_pad * kc * c_out + 5 * rows_pad * kc)
    bytes_io = int(4 * (xcol.size + mask.size + scale3.size + shift3.size
                        + w_col.size + rows_pad * c_out + 2 * c_out))
    return pl.pallas_call(
        kernel,
        out_shape=(jax.ShapeDtypeStruct((rows_pad, c_out), jnp.float32),
                   jax.ShapeDtypeStruct((2, c_out), jnp.float32)),
        grid_spec=pltpu.PrefetchScalarGridSpec(
            num_scalar_prefetch=0,
            grid=(n_tiles,),
            in_specs=[_row_spec(tile_rows, kc),
                      pl.BlockSpec((tile_rows, 2), lambda t: (t, 0)),
                      _full_spec(scale3.shape), _full_spec(shift3.shape),
                      _full_spec(w_col.shape)],
            out_specs=(_row_spec(tile_rows, c_out), _full_spec((2, c_out))),
            scratch_shapes=[pltpu.VMEM((1, c_out), jnp.float32),
                            pltpu.VMEM((1, c_out), jnp.float32)]),
        compiler_params=pltpu.CompilerParams(
            dimension_semantics=("arbitrary",),   # stats reduction axis
            vmem_limit_bytes=VMEM_LIMIT_BYTES),
        cost_estimate=pl.CostEstimate(
            flops=flops, transcendentals=0, bytes_accessed=bytes_io),
    )(xcol, mask, scale3, shift3, w_col)


def residual_bn_relu_pass2(y_raw, scale, shift, res, *, tile_rows,
                           res_scale=None, res_shift=None):
    rows_pad, c_out = y_raw.shape
    n_tiles = rows_pad // tile_rows
    if res_scale is None:
        kernel = _affine_add_relu_kernel
        operands = (y_raw, scale, shift, res)
        in_specs = [_row_spec(tile_rows, c_out), _full_spec(scale.shape),
                    _full_spec(shift.shape),
                    _row_spec(tile_rows, res.shape[1])]
    else:
        kernel = _affine2_add_relu_kernel
        operands = (y_raw, scale, shift, res, res_scale, res_shift)
        in_specs = [_row_spec(tile_rows, c_out), _full_spec(scale.shape),
                    _full_spec(shift.shape), _row_spec(tile_rows, c_out),
                    _full_spec(res_scale.shape), _full_spec(res_shift.shape)]
    return pl.pallas_call(
        kernel,
        out_shape=jax.ShapeDtypeStruct((rows_pad, c_out), jnp.float32),
        grid_spec=pltpu.PrefetchScalarGridSpec(
            num_scalar_prefetch=0, grid=(n_tiles,),
            in_specs=in_specs,
            out_specs=_row_spec(tile_rows, c_out)),
        compiler_params=pltpu.CompilerParams(
            dimension_semantics=("parallel",),
            vmem_limit_bytes=VMEM_LIMIT_BYTES),
        cost_estimate=pl.CostEstimate(
            flops=int(6 * y_raw.size), transcendentals=0,
            bytes_accessed=int(4 * (2 * y_raw.size + res.size))),
    )(*operands)


# ------------------------------ block forward -------------------------------
def basic_block_forward(x_ncl, params, strides, *, eps=1e-5,
                        tile_rows=DEFAULT_TILE_ROWS):
    """BasicBlock.forward: relu(BN(conv2(relu(BN(conv1(x))))) + shortcut(x))."""
    n, c_in, l = x_ncl.shape
    c_out = params["w1"].shape[0]
    cp_in = _round_up(c_in, LANE)
    cp_out = _round_up(c_out, LANE)

    # NCW -> NLC, channel-pad to a lane multiple (padded channels stay zero
    # through conv+BN because padded gamma=1 / beta=0, and are sliced off).
    # TODO(synk): fold these boundary transposes into the first/last kernel's
    # BlockSpec instead of separate XLA transposes.
    x_nlc = jnp.transpose(x_ncl, (0, 2, 1)).astype(jnp.float32)
    x_nlc = _pad_axis(x_nlc, 2, cp_in)

    # ---- pass 1: conv1 (+ fused 1x1 shortcut conv when strided) ----
    xcol1, l1 = _im2col(x_nlc, 3, strides, 1)
    rows = n * l1                      # conv2 keeps the length: L2 == L1
    tr = _pick_tile_rows(rows, tile_rows)
    xcol1 = _pad_rows(xcol1, tr)

    w1 = _conv_weight(params["w1"], cp_in, cp_out)
    g1 = _bn_param(params["g1"], cp_out, 1.0)
    b1 = _bn_param(params["b1"], cp_out, 0.0)

    if strides != 1:
        ws = _conv_weight(params["ws"], cp_in, cp_out)
        h1_raw, sc_raw, st1, st_sc = conv_bn_pass1(
            xcol1, w1, rows_true=rows, tile_rows=tr,
            ws_col=ws, cp_in=cp_in, sc_tap=1)   # tap 1 == spatial offset 0
    else:
        h1_raw, st1 = conv_bn_pass1(xcol1, w1, rows_true=rows, tile_rows=tr)
        sc_raw = st_sc = None

    # ---- pass 2: BN1 + ReLU fused into conv2's matmul kernel ----
    scale1, shift1 = _bn_scale_shift(st1, g1, b1, eps)
    scale3 = jnp.tile(scale1, (1, 3))          # per-tap copy along lanes
    shift3 = jnp.tile(shift1, (1, 3))

    h1_nlc = h1_raw[:rows].reshape(n, l1, cp_out)   # raw conv1 output, NLC
    xcol2, l2 = _im2col(h1_nlc, 3, 1, 1)
    xcol2 = _pad_rows(xcol2, tr)

    # conv2's spatial zero padding must stay zero AFTER BN1+ReLU -> mask the
    # left/right taps of the first/last spatial positions inside the kernel.
    l_idx = jnp.broadcast_to(jnp.arange(l1, dtype=jnp.int32),
                             (n, l1)).reshape(-1)
    mask = jnp.stack([(l_idx != 0), (l_idx != l1 - 1)],
                     axis=-1).astype(jnp.float32)
    mask = _pad_rows(mask, tr)

    w2 = _conv_weight(params["w2"], cp_out, cp_out)
    h2_raw, st2 = bnrelu_conv_bn_pass1(xcol2, mask, scale3, shift3, w2,
                                       rows_true=rows, tile_rows=tr,
                                       cp=cp_out)

    # ---- final: BN2 + shortcut BN (or identity) + residual add + ReLU ----
    g2 = _bn_param(params["g2"], cp_out, 1.0)
    b2 = _bn_param(params["b2"], cp_out, 0.0)
    scale2, shift2 = _bn_scale_shift(st2, g2, b2, eps)

    if strides != 1:
        gs = _bn_param(params["gs"], cp_out, 1.0)
        bs = _bn_param(params["bs"], cp_out, 0.0)
        scale_s, shift_s = _bn_scale_shift(st_sc, gs, bs, eps)
        out = residual_bn_relu_pass2(h2_raw, scale2, shift2, sc_raw,
                                     tile_rows=tr,
                                     res_scale=scale_s, res_shift=shift_s)
    else:
        res = _pad_rows(x_nlc.reshape(n * l, cp_in), tr)
        out = residual_bn_relu_pass2(h2_raw, scale2, shift2, res,
                                     tile_rows=tr)

    out = out[:rows, :c_out].reshape(n, l2, c_out)
    return jnp.transpose(out, (0, 2, 1))   # NLC -> NCW


# ---------------- pure-JAX reference (PyTorch semantics) --------------------
def reference_forward(x, params, strides, eps=1e-5):
    def conv1d(x, w, stride, padding):
        return lax.conv_general_dilated(
            x, w, window_strides=(stride,), padding=((padding, padding),),
            dimension_numbers=("NCH", "OIH", "NCH"))

    def bn(x, g, b):
        mean = jnp.mean(x, axis=(0, 2), keepdims=True)
        var = jnp.mean((x - mean) ** 2, axis=(0, 2), keepdims=True)
        return (x - mean) / jnp.sqrt(var + eps) * g[None, :, None] \
            + b[None, :, None]

    h = jax.nn.relu(bn(conv1d(x, params["w1"], strides, 1),
                       params["g1"], params["b1"]))
    h = bn(conv1d(h, params["w2"], 1, 1), params["g2"], params["b2"])
    if strides != 1:
        sc = bn(conv1d(x, params["ws"], strides, 0),
                params["gs"], params["bs"])
    else:
        sc = x
    return jax.nn.relu(h + sc)


if __name__ == "__main__":
    N, C_IN, C_OUT, L, STRIDES = 2, 4, 8, 16, 2

    keys = jax.random.split(jax.random.PRNGKey(0), 16)
    params = {
        "w1": 0.2 * jax.random.normal(keys[0], (C_OUT, C_IN, 3), jnp.float32),
        "g1": 1.0 + 0.1 * jax.random.normal(keys[1], (C_OUT,), jnp.float32),
        "b1": 0.1 * jax.random.normal(keys[2], (C_OUT,), jnp.float32),
        "w2": 0.2 * jax.random.normal(keys[3], (C_OUT, C_OUT, 3), jnp.float32),
        "g2": 1.0 + 0.1 * jax.random.normal(keys[4], (C_OUT,), jnp.float32),
        "b2": 0.1 * jax.random.normal(keys[5], (C_OUT,), jnp.float32),
        "ws": 0.2 * jax.random.normal(keys[6], (C_OUT, C_IN, 1), jnp.float32),
        "gs": 1.0 + 0.1 * jax.random.normal(keys[7], (C_OUT,), jnp.float32),
        "bs": 0.1 * jax.random.normal(keys[8], (C_OUT,), jnp.float32),
    }
    x = jax.random.normal(keys[9], (N, C_IN, L), jnp.float32)

    fwd = jax.jit(basic_block_forward, static_argnums=(2,))

    # strided block (1x1 conv + BN shortcut path)
    out = jax.block_until_ready(fwd(x, params, STRIDES))
    ref = jax.block_until_ready(reference_forward(x, params, STRIDES))
    l_out = (L + 2 - 3) // STRIDES + 1
    assert out.shape == (N, C_OUT, l_out), out.shape
    np.testing.assert_allclose(np.asarray(out), np.asarray(ref),
                               rtol=1e-4, atol=1e-4)

    # stride-1 block (identity shortcut path, Cin == Cout)
    params_id = {
        "w1": 0.2 * jax.random.normal(keys[10], (C_OUT, C_OUT, 3), jnp.float32),
        "g1": 1.0 + 0.1 * jax.random.normal(keys[11], (C_OUT,), jnp.float32),
        "b1": 0.1 * jax.random.normal(keys[12], (C_OUT,), jnp.float32),
        "w2": 0.2 * jax.random.normal(keys[13], (C_OUT, C_OUT, 3), jnp.float32),
        "g2": 1.0 + 0.1 * jax.random.normal(keys[14], (C_OUT,), jnp.float32),
        "b2": 0.1 * jax.random.normal(keys[15], (C_OUT,), jnp.float32),
    }
    x_id = jax.random.normal(keys[9], (N, C_OUT, L), jnp.float32)
    out_id = jax.block_until_ready(fwd(x_id, params_id, 1))
    ref_id = jax.block_until_ready(reference_forward(x_id, params_id, 1))
    assert out_id.shape == (N, C_OUT, L), out_id.shape
    np.testing.assert_allclose(np.asarray(out_id), np.asarray(ref_id),
                               rtol=1e-4, atol=1e-4)

    print("KERNEL_OK")
</pallas_src>

<mosaic_0001>
module attributes {stable_mosaic.version = 11 : i64} {
  func.func @_conv_shortcut_stats_kernel(%arg0: i32, %arg1: memref<16x384xf32, #tpu.memory_space<vmem>>, %arg2: memref<384x128xf32, #tpu.memory_space<vmem>>, %arg3: memref<128x128xf32, #tpu.memory_space<vmem>>, %arg4: memref<16x128xf32, #tpu.memory_space<vmem>>, %arg5: memref<16x128xf32, #tpu.memory_space<vmem>>, %arg6: memref<2x128xf32, #tpu.memory_space<vmem>>, %arg7: memref<2x128xf32, #tpu.memory_space<vmem>>, %arg8: memref<1x128xf32, #tpu.memory_space<vmem>>, %arg9: memref<1x128xf32, #tpu.memory_space<vmem>>, %arg10: memref<1x128xf32, #tpu.memory_space<vmem>>, %arg11: memref<1x128xf32, #tpu.memory_space<vmem>>) attributes {dimension_semantics = [#tpu.dimension_semantics<arbitrary>], iteration_bounds = array<i64: 1>, scalar_prefetch = 0 : i64, scratch_operands = 4 : i64, tpu.core_type = #tpu.core_type<tc>, window_params = [{transform_indices = @transform_0, window_bounds = array<i64: 16, 384>}, {pipeline_mode = #tpu.pipeline_mode<synchronous>, transform_indices = @transform_1, window_bounds = array<i64: 384, 128>}, {pipeline_mode = #tpu.pipeline_mode<synchronous>, transform_indices = @transform_2, window_bounds = array<i64: 128, 128>}, {transform_indices = @transform_3, window_bounds = array<i64: 16, 128>}, {transform_indices = @transform_4, window_bounds = array<i64: 16, 128>}, {pipeline_mode = #tpu.pipeline_mode<synchronous>, transform_indices = @transform_5, window_bounds = array<i64: 2, 128>}, {pipeline_mode = #tpu.pipeline_mode<synchronous>, transform_indices = @transform_6, window_bounds = array<i64: 2, 128>}]} {
    %c0_i32 = arith.constant 0 : i32
    %0 = arith.cmpi eq, %arg0, %c0_i32 : i32
    %1 = arith.extui %0 : i1 to i32
    %c0_i32_0 = arith.constant 0 : i32
    %2 = arith.cmpi ne, %1, %c0_i32_0 : i32
    scf.if %2 {
      %cst_48 = arith.constant 0.000000e+00 : f32
      %104 = vector.broadcast %cst_48 : f32 to vector<1x128xf32>
      %c0_49 = arith.constant 0 : index
      %c0_50 = arith.constant 0 : index
      %105 = vector.load %arg8[%c0_49, %c0_50] : memref<1x128xf32, #tpu.memory_space<vmem>>, vector<1x128xf32>
      tpu.vector_store %arg8[%c0_49, %c0_50], %104 {strides = array<i32>} : memref<1x128xf32, #tpu.memory_space<vmem>>, vector<1x128xf32>,
      %cst_51 = arith.constant 0.000000e+00 : f32
      %106 = vector.broadcast %cst_51 : f32 to vector<1x128xf32>
      %c0_52 = arith.constant 0 : index
      %c0_53 = arith.constant 0 : index
      %107 = vector.load %arg9[%c0_52, %c0_53] : memref<1x128xf32, #tpu.memory_space<vmem>>, vector<1x128xf32>
      tpu.vector_store %arg9[%c0_52, %c0_53], %106 {strides = array<i32>} : memref<1x128xf32, #tpu.memory_space<vmem>>, vector<1x128xf32>,
      %cst_54 = arith.constant 0.000000e+00 : f32
      %108 = vector.broadcast %cst_54 : f32 to vector<1x128xf32>
      %c0_55 = arith.constant 0 : index
      %c0_56 = arith.constant 0 : index
      %109 = vector.load %arg10[%c0_55, %c0_56] : memref<1x128xf32, #tpu.memory_space<vmem>>, vector<1x128xf32>
      tpu.vector_store %arg10[%c0_55, %c0_56], %108 {strides = array<i32>} : memref<1x128xf32, #tpu.memory_space<vmem>>, vector<1x128xf32>,
      %cst_57 = arith.constant 0.000000e+00 : f32
      %110 = vector.broadcast %cst_57 : f32 to vector<1x128xf32>
      %c0_58 = arith.constant 0 : index
      %c0_59 = arith.constant 0 : index
      %111 = vector.load %arg11[%c0_58, %c0_59] : memref<1x128xf32, #tpu.memory_space<vmem>>, vector<1x128xf32>
      tpu.vector_store %arg11[%c0_58, %c0_59], %110 {strides = array<i32>} : memref<1x128xf32, #tpu.memory_space<vmem>>, vector<1x128xf32>,
    } else {
    }
    %c0 = arith.constant 0 : index
    %c0_1 = arith.constant 0 : index
    %3 = vector.load %arg1[%c0, %c0_1] : memref<16x384xf32, #tpu.memory_space<vmem>>, vector<16x384xf32>
    %c0_2 = arith.constant 0 : index
    %c0_3 = arith.constant 0 : index
    %4 = vector.load %arg2[%c0_2, %c0_3] : memref<384x128xf32, #tpu.memory_space<vmem>>, vector<384x128xf32>
    %cst = arith.constant dense<0.000000e+00> : vector<16x128xf32>
    %5 = tpu.matmul %3, %4, %cst {dimension_numbers = #tpu.dot_dimension_numbers<[1], [0], [0], [1], [0, 0, 1, 1], [], []>} : vector<16x384xf32>, vector<384x128xf32>, vector<16x128xf32> -> vector<16x128xf32>
    %c0_4 = arith.constant 0 : index
    %c0_5 = arith.constant 0 : index
    %6 = vector.load %arg4[%c0_4, %c0_5] : memref<16x128xf32, #tpu.memory_space<vmem>>, vector<16x128xf32>
    tpu.vector_store %arg4[%c0_4, %c0_5], %5 {strides = array<i32>} : memref<16x128xf32, #tpu.memory_space<vmem>>, vector<16x128xf32>,
    %c16_i32 = arith.constant 16 : i32
    %7 = arith.muli %arg0, %c16_i32 : i32
    %8 = tpu.iota {dimensions = array<i32: 0>} : vector<16x1xi32>
    %9 = vector.broadcast %7 : i32 to vector<16x1xi32>
    %10 = arith.addi %9, %8 : vector<16x1xi32>
    %c16_i32_6 = arith.constant 16 : i32
    %11 = vector.broadcast %c16_i32_6 : i32 to vector<16x1xi32>
    %12 = arith.cmpi slt, %10, %11 : vector<16x1xi32>
    %13 = arith.extui %12 : vector<16x1xi1> to vector<16x1xi32>
    %14 = arith.sitofp %13 : vector<16x1xi32> to vector<16x1xf32>
    %c16_i32_7 = arith.constant 16 : i32
    %15 = arith.subi %c16_i32_7, %7 : i32
    %c16_i32_8 = arith.constant 16 : i32
    %16 = arith.minsi %15, %c16_i32_8 : i32
    %17 = arith.sitofp %16 : i32 to f32
    %c16_i32_9 = arith.constant 16 : i32
    %18 = arith.minsi %7, %c16_i32_9 : i32
    %19 = arith.sitofp %18 : i32 to f32
    %20 = vector.broadcast %14 : vector<16x1xf32> to vector<16x128xf32>
    %21 = arith.mulf %5, %20 : vector<16x128xf32>
    %cst_10 = arith.constant dense<0.000000e+00> : vector<128xf32>
    %22 = vector.multi_reduction <add>, %21, %cst_10 [0] : vector<16x128xf32> to vector<128xf32>
    %23 = vector.shape_cast %22 : vector<128xf32> to vector<1x128xf32>
    %cst_11 = arith.constant 1.000000e+00 : f32
    %24 = arith.divf %cst_11, %17 : f32
    %25 = vector.broadcast %24 : f32 to vector<1x128xf32>
    %26 = arith.mulf %23, %25 : vector<1x128xf32>
    %27 = vector.broadcast %26 : vector<1x128xf32> to vector<16x128xf32>
    %28 = arith.subf %5, %27 : vector<16x128xf32>
    %29 = vector.broadcast %14 : vector<16x1xf32> to vector<16x128xf32>
    %30 = arith.mulf %28, %29 : vector<16x128xf32>
    %31 = arith.mulf %30, %30 : vector<16x128xf32>
    %cst_12 = arith.constant dense<0.000000e+00> : vector<128xf32>
    %32 = vector.multi_reduction <add>, %31, %cst_12 [0] : vector<16x128xf32> to vector<128xf32>
    %33 = vector.shape_cast %32 : vector<128xf32> to vector<1x128xf32>
    %34 = arith.addf %19, %17 : f32
    %c0_13 = arith.constant 0 : index
    %c0_14 = arith.constant 0 : index
    %35 = vector.load %arg8[%c0_13, %c0_14] : memref<1x128xf32, #tpu.memory_space<vmem>>, vector<1x128xf32>
    %36 = arith.subf %26, %35 : vector<1x128xf32>
    %c0_15 = arith.constant 0 : index
    %c0_16 = arith.constant 0 : index
    %37 = vector.load %arg8[%c0_15, %c0_16] : memref<1x128xf32, #tpu.memory_space<vmem>>, vector<1x128xf32>
    %38 = arith.divf %17, %34 : f32
    %39 = vector.broadcast %38 : f32 to vector<1x128xf32>
    %40 = arith.mulf %36, %39 : vector<1x128xf32>
    %41 = arith.addf %37, %40 : vector<1x128xf32>
    %c0_17 = arith.constant 0 : index
    %c0_18 = arith.constant 0 : index
    %42 = vector.load %arg8[%c0_17, %c0_18] : memref<1x128xf32, #tpu.memory_space<vmem>>, vector<1x128xf32>
    tpu.vector_store %arg8[%c0_17, %c0_18], %41 {strides = array<i32>} : memref<1x128xf32, #tpu.memory_space<vmem>>, vector<1x128xf32>,
    %c0_19 = arith.constant 0 : index
    %c0_20 = arith.constant 0 : index
    %43 = vector.load %arg9[%c0_19, %c0_20] : memref<1x128xf32, #tpu.memory_space<vmem>>, vector<1x128xf32>
    %44 = arith.addf %43, %33 : vector<1x128xf32>
    %45 = arith.mulf %36, %36 : vector<1x128xf32>
    %46 = arith.mulf %19, %17 : f32
    %47 = arith.divf %46, %34 : f32
    %48 = vector.broadcast %47 : f32 to vector<1x128xf32>
    %49 = arith.mulf %45, %48 : vector<1x128xf32>
    %50 = arith.addf %44, %49 : vector<1x128xf32>
    %c0_21 = arith.constant 0 : index
    %c0_22 = arith.constant 0 : index
    %51 = vector.load %arg9[%c0_21, %c0_22] : memref<1x128xf32, #tpu.memory_space<vmem>>, vector<1x128xf32>
    tpu.vector_store %arg9[%c0_21, %c0_22], %50 {strides = array<i32>} : memref<1x128xf32, #tpu.memory_space<vmem>>, vector<1x128xf32>,
    %52 = vector.extract_strided_slice %3 {offsets = [0, 128], sizes = [16, 128], strides = [1, 1]} : vector<16x384xf32> to vector<16x128xf32>
    %c0_23 = arith.constant 0 : index
    %c0_24 = arith.constant 0 : index
    %53 = vector.load %arg3[%c0_23, %c0_24] : memref<128x128xf32, #tpu.memory_space<vmem>>, vector<128x128xf32>
    %cst_25 = arith.constant dense<0.000000e+00> : vector<16x128xf32>
    %54 = tpu.matmul %52, %53, %cst_25 {dimension_numbers = #tpu.dot_dimension_numbers<[1], [0], [0], [1], [0, 0, 1, 1], [], []>} : vector<16x128xf32>, vector<128x128xf32>, vector<16x128xf32> -> vector<16x128xf32>
    %c0_26 = arith.constant 0 : index
    %c0_27 = arith.constant 0 : index
    %55 = vector.load %arg5[%c0_26, %c0_27] : memref<16x128xf32, #tpu.memory_space<vmem>>, vector<16x128xf32>
    tpu.vector_store %arg5[%c0_26, %c0_27], %54 {strides = array<i32>} : memref<16x128xf32, #tpu.memory_space<vmem>>, vector<16x128xf32>,
    %c16_i32_28 = arith.constant 16 : i32
    %56 = arith.muli %arg0, %c16_i32_28 : i32
    %57 = tpu.iota {dimensions = array<i32: 0>} : vector<16x1xi32>
    %58 = vector.broadcast %56 : i32 to vector<16x1xi32>
    %59 = arith.addi %58, %57 : vector<16x1xi32>
    %c16_i32_29 = arith.constant 16 : i32
    %60 = vector.broadcast %c16_i32_29 : i32 to vector<16x1xi32>
    %61 = arith.cmpi slt, %59, %60 : vector<16x1xi32>
    %62 = arith.extui %61 : vector<16x1xi1> to vector<16x1xi32>
    %63 = arith.sitofp %62 : vector<16x1xi32> to vector<16x1xf32>
    %c16_i32_30 = arith.constant 16 : i32
    %64 = arith.subi %c16_i32_30, %56 : i32
    %c16_i32_31 = arith.constant 16 : i32
    %65 = arith.minsi %64, %c16_i32_31 : i32
    %66 = arith.sitofp %65 : i32 to f32
    %c16_i32_32 = arith.constant 16 : i32
    %67 = arith.minsi %56, %c16_i32_32 : i32
    %68 = arith.sitofp %67 : i32 to f32
    %69 = vector.broadcast %63 : vector<16x1xf32> to vector<16x128xf32>
    %70 = arith.mulf %54, %69 : vector<16x128xf32>
    %cst_33 = arith.constant dense<0.000000e+00> : vector<128xf32>
    %71 = vector.multi_reduction <add>, %70, %cst_33 [0] : vector<16x128xf32> to vector<128xf32>
    %72 = vector.shape_cast %71 : vector<128xf32> to vector<1x128xf32>
    %cst_34 = arith.constant 1.000000e+00 : f32
    %73 = arith.divf %cst_34, %66 : f32
    %74 = vector.broadcast %73 : f32 to vector<1x128xf32>
    %75 = arith.mulf %72, %74 : vector<1x128xf32>
    %76 = vector.broadcast %75 : vector<1x128xf32> to vector<16x128xf32>
    %77 = arith.subf %54, %76 : vector<16x128xf32>
    %78 = vector.broadcast %63 : vector<16x1xf32> to vector<16x128xf32>
    %79 = arith.mulf %77, %78 : vector<16x128xf32>
    %80 = arith.mulf %79, %79 : vector<16x128xf32>
    %cst_35 = arith.constant dense<0.000000e+00> : vector<128xf32>
    %81 = vector.multi_reduction <add>, %80, %cst_35 [0] : vector<16x128xf32> to vector<128xf32>
    %82 = vector.shape_cast %81 : vector<128xf32> to vector<1x128xf32>
    %83 = arith.addf %68, %66 : f32
    %c0_36 = arith.constant 0 : index
    %c0_37 = arith.constant 0 : index
    %84 = vector.load %arg10[%c0_36, %c0_37] : memref<1x128xf32, #tpu.memory_space<vmem>>, vector<1x128xf32>
    %85 = arith.subf %75, %84 : vector<1x128xf32>
    %c0_38 = arith.constant 0 : index
    %c0_39 = arith.constant 0 : index
    %86 = vector.load %arg10[%c0_38, %c0_39] : memref<1x128xf32, #tpu.memory_space<vmem>>, vector<1x128xf32>
    %87 = arith.divf %66, %83 : f32
    %88 = vector.broadcast %87 : f32 to vector<1x128xf32>
    %89 = arith.mulf %85, %88 : vector<1x128xf32>
    %90 = arith.addf %86, %89 : vector<1x128xf32>
    %c0_40 = arith.constant 0 : index
    %c0_41 = arith.constant 0 : index
    %91 = vector.load %arg10[%c0_40, %c0_41] : memref<1x128xf32, #tpu.memory_space<vmem>>, vector<1x128xf32>
    tpu.vector_store %arg10[%c0_40, %c0_41], %90 {strides = array<i32>} : memref<1x128xf32, #tpu.memory_space<vmem>>, vector<1x128xf32>,
    %c0_42 = arith.constant 0 : index
    %c0_43 = arith.constant 0 : index
    %92 = vector.load %arg11[%c0_42, %c0_43] : memref<1x128xf32, #tpu.memory_space<vmem>>, vector<1x128xf32>
    %93 = arith.addf %92, %82 : vector<1x128xf32>
    %94 = arith.mulf %85, %85 : vector<1x128xf32>
    %95 = arith.mulf %68, %66 : f32
    %96 = arith.divf %95, %83 : f32
    %97 = vector.broadcast %96 : f32 to vector<1x128xf32>
    %98 = arith.mulf %94, %97 : vector<1x128xf32>
    %99 = arith.addf %93, %98 : vector<1x128xf32>
    %c0_44 = arith.constant 0 : index
    %c0_45 = arith.constant 0 : index
    %100 = vector.load %arg11[%c0_44, %c0_45] : memref<1x128xf32, #tpu.memory_space<vmem>>, vector<1x128xf32>
    tpu.vector_store %arg11[%c0_44, %c0_45], %99 {strides = array<i32>} : memref<1x128xf32, #tpu.memory_space<vmem>>, vector<1x128xf32>,
    %c0_i32_46 = arith.constant 0 : i32
    %101 = arith.cmpi eq, %arg0, %c0_i32_46 : i32
    %102 = arith.extui %101 : i1 to i32
    %c0_i32_47 = arith.constant 0 : i32
    %103 = arith.cmpi ne, %102, %c0_i32_47 : i32
    scf.if %103 {
      %c0_48 = arith.constant 0 : index
      %c0_49 = arith.constant 0 : index
      %104 = vector.load %arg8[%c0_48, %c0_49] : memref<1x128xf32, #tpu.memory_space<vmem>>, vector<1x128xf32>
      %c0_50 = arith.constant 0 : index
      %c0_51 = arith.constant 0 : index
      %105 = vector.load %arg6[%c0_50, %c0_51] : memref<2x128xf32, #tpu.memory_space<vmem>>, vector<1x128xf32>
      tpu.vector_store %arg6[%c0_50, %c0_51], %104 {strides = array<i32>} : memref<2x128xf32, #tpu.memory_space<vmem>>, vector<1x128xf32>,
      %c0_52 = arith.constant 0 : index
      %c0_53 = arith.constant 0 : index
      %106 = vector.load %arg9[%c0_52, %c0_53] : memref<1x128xf32, #tpu.memory_space<vmem>>, vector<1x128xf32>
      %cst_54 = arith.constant 6.250000e-02 : f32
      %107 = vector.broadcast %cst_54 : f32 to vector<1x128xf32>
      %108 = arith.mulf %106, %107 : vector<1x128xf32>
      %c1 = arith.constant 1 : index
      %c0_55 = arith.constant 0 : index
      %109 = vector.load %arg6[%c1, %c0_55] : memref<2x128xf32, #tpu.memory_space<vmem>>, vector<1x128xf32>
      tpu.vector_store %arg6[%c1, %c0_55], %108 {strides = array<i32>} : memref<2x128xf32, #tpu.memory_space<vmem>>, vector<1x128xf32>,
      %c0_56 = arith.constant 0 : index
      %c0_57 = arith.constant 0 : index
      %110 = vector.load %arg10[%c0_56, %c0_57] : memref<1x128xf32, #tpu.memory_space<vmem>>, vector<1x128xf32>
      %c0_58 = arith.constant 0 : index
      %c0_59 = arith.constant 0 : index
      %111 = vector.load %arg7[%c0_58, %c0_59] : memref<2x128xf32, #tpu.memory_space<vmem>>, vector<1x128xf32>
      tpu.vector_store %arg7[%c0_58, %c0_59], %110 {strides = array<i32>} : memref<2x128xf32, #tpu.memory_space<vmem>>, vector<1x128xf32>,
      %c0_60 = arith.constant 0 : index
      %c0_61 = arith.constant 0 : index
      %112 = vector.load %arg11[%c0_60, %c0_61] : memref<1x128xf32, #tpu.memory_space<vmem>>, vector<1x128xf32>
      %cst_62 = arith.constant 6.250000e-02 : f32
      %113 = vector.broadcast %cst_62 : f32 to vector<1x128xf32>
      %114 = arith.mulf %112, %113 : vector<1x128xf32>
      %c1_63 = arith.constant 1 : index
      %c0_64 = arith.constant 0 : index
      %115 = vector.load %arg7[%c1_63, %c0_64] : memref<2x128xf32, #tpu.memory_space<vmem>>, vector<1x128xf32>
      tpu.vector_store %arg7[%c1_63, %c0_64], %114 {strides = array<i32>} : memref<2x128xf32, #tpu.memory_space<vmem>>, vector<1x128xf32>,
    } else {
    }
    return
  }
  func.func @transform_0(%arg0: i32) -> (i32, i32) {
    %c0_i32 = arith.constant 0 : i32
    %c0_i32_0 = arith.constant 0 : i32
    return %arg0, %c0_i32 : i32, i32
  }
  func.func @transform_1(%arg0: i32) -> (i32, i32) {
    %c0_i32 = arith.constant 0 : i32
    %c0_i32_0 = arith.constant 0 : i32
    %c0_i32_1 = arith.constant 0 : i32
    return %c0_i32, %c0_i32_0 : i32, i32
  }
  func.func @transform_2(%arg0: i32) -> (i32, i32) {
    %c0_i32 = arith.constant 0 : i32
    %c0_i32_0 = arith.constant 0 : i32
    %c0_i32_1 = arith.constant 0 : i32
    return %c0_i32, %c0_i32_0 : i32, i32
  }
  func.func @transform_3(%arg0: i32) -> (i32, i32) {
    %c0_i32 = arith.constant 0 : i32
    %c0_i32_0 = arith.constant 0 : i32
    return %arg0, %c0_i32 : i32, i32
  }
  func.func @transform_4(%arg0: i32) -> (i32, i32) {
    %c0_i32 = arith.constant 0 : i32
    %c0_i32_0 = arith.constant 0 : i32
    return %arg0, %c0_i32 : i32, i32
  }
  func.func @transform_5(%arg0: i32) -> (i32, i32) {
    %c0_i32 = arith.constant 0 : i32
    %c0_i32_0 = arith.constant 0 : i32
    %c0_i32_1 = arith.constant 0 : i32
    return %c0_i32, %c0_i32_0 : i32, i32
  }
  func.func @transform_6(%arg0: i32) -> (i32, i32) {
    %c0_i32 = arith.constant 0 : i32
    %c0_i32_0 = arith.constant 0 : i32
    %c0_i32_1 = arith.constant 0 : i32
    return %c0_i32, %c0_i32_0 : i32, i32
  }
}

module attributes {stable_mosaic.version = 11 : i64} {
  func.func @_affine2_add_relu_kernel(%arg0: i32, %arg1: memref<16x128xf32, #tpu.memory_space<vmem>>, %arg2: memref<1x128xf32, #tpu.memory_space<vmem>>, %arg3: memref<1x128xf32, #tpu.memory_space<vmem>>, %arg4: memref<16x128xf32, #tpu.memory_space<vmem>>, %arg5: memref<1x128xf32, #tpu.memory_space<vmem>>, %arg6: memref<1x128xf32, #tpu.memory_space<vmem>>, %arg7: memref<16x128xf32, #tpu.memory_space<vmem>>) attributes {dimension_semantics = [#tpu.dimension_semantics<parallel>], iteration_bounds = array<i64: 1>, scalar_prefetch = 0 : i64, scratch_operands = 0 : i64, tpu.core_type = #tpu.core_type<tc>, window_params = [{transform_indices = @transform_0, window_bounds = array<i64: 16, 128>}, {pipeline_mode = #tpu.pipeline_mode<synchronous>, transform_indices = @transform_1, window_bounds = array<i64: 1, 128>}, {pipeline_mode = #tpu.pipeline_mode<synchronous>, transform_indices = @transform_2, window_bounds = array<i64: 1, 128>}, {transform_indices = @transform_3, window_bounds = array<i64: 16, 128>}, {pipeline_mode = #tpu.pipeline_mode<synchronous>, transform_indices = @transform_4, window_bounds = array<i64: 1, 128>}, {pipeline_mode = #tpu.pipeline_mode<synchronous>, transform_indices = @transform_5, window_bounds = array<i64: 1, 128>}, {transform_indices = @transform_6, window_bounds = array<i64: 16, 128>}]} {
    %c0 = arith.constant 0 : index
    %c0_0 = arith.constant 0 : index
    %0 = vector.load %arg1[%c0, %c0_0] : memref<16x128xf32, #tpu.memory_space<vmem>>, vector<16x128xf32>
    %c0_1 = arith.constant 0 : index
    %c0_2 = arith.constant 0 : index
    %1 = vector.load %arg2[%c0_1, %c0_2] : memref<1x128xf32, #tpu.memory_space<vmem>>, vector<1x128xf32>
    %2 = vector.broadcast %1 : vector<1x128xf32> to vector<16x128xf32>
    %3 = arith.mulf %0, %2 : vector<16x128xf32>
    %c0_3 = arith.constant 0 : index
    %c0_4 = arith.constant 0 : index
    %4 = vector.load %arg3[%c0_3, %c0_4] : memref<1x128xf32, #tpu.memory_space<vmem>>, vector<1x128xf32>
    %5 = vector.broadcast %4 : vector<1x128xf32> to vector<16x128xf32>
    %6 = arith.addf %3, %5 : vector<16x128xf32>
    %c0_5 = arith.constant 0 : index
    %c0_6 = arith.constant 0 : index
    %7 = vector.load %arg4[%c0_5, %c0_6] : memref<16x128xf32, #tpu.memory_space<vmem>>, vector<16x128xf32>
    %c0_7 = arith.constant 0 : index
    %c0_8 = arith.constant 0 : index
    %8 = vector.load %arg5[%c0_7, %c0_8] : memref<1x128xf32, #tpu.memory_space<vmem>>, vector<1x128xf32>
    %9 = vector.broadcast %8 : vector<1x128xf32> to vector<16x128xf32>
    %10 = arith.mulf %7, %9 : vector<16x128xf32>
    %11 = arith.addf %6, %10 : vector<16x128xf32>
    %c0_9 = arith.constant 0 : index
    %c0_10 = arith.constant 0 : index
    %12 = vector.load %arg6[%c0_9, %c0_10] : memref<1x128xf32, #tpu.memory_space<vmem>>, vector<1x128xf32>
    %13 = vector.broadcast %12 : vector<1x128xf32> to vector<16x128xf32>
    %14 = arith.addf %11, %13 : vector<16x128xf32>
    %cst = arith.constant 0.000000e+00 : f32
    %15 = vector.broadcast %cst : f32 to vector<16x128xf32>
    %16 = arith.maximumf %14, %15 : vector<16x128xf32>
    %c0_11 = arith.constant 0 : index
    %c0_12 = arith.constant 0 : index
    %17 = vector.load %arg7[%c0_11, %c0_12] : memref<16x128xf32, #tpu.memory_space<vmem>>, vector<16x128xf32>
    tpu.vector_store %arg7[%c0_11, %c0_12], %16 {strides = array<i32>} : memref<16x128xf32, #tpu.memory_space<vmem>>, vector<16x128xf32>,
    return
  }
  func.func @transform_0(%arg0: i32) -> (i32, i32) {
    %c0_i32 = arith.constant 0 : i32
    %c0_i32_0 = arith.constant 0 : i32
    return %arg0, %c0_i32 : i32, i32
  }
  func.func @transform_1(%arg0: i32) -> (i32, i32) {
    %c0_i32 = arith.constant 0 : i32
    %c0_i32_0 = arith.constant 0 : i32
    %c0_i32_1 = arith.constant 0 : i32
    return %c0_i32, %c0_i32_0 : i32, i32
  }
  func.func @transform_2(%arg0: i32) -> (i32, i32) {
    %c0_i32 = arith.constant 0 : i32
    %c0_i32_0 = arith.constant 0 : i32
    %c0_i32_1 = arith.constant 0 : i32
    return %c0_i32, %c0_i32_0 : i32, i32
  }
  func.func @transform_3(%arg0: i32) -> (i32, i32) {
    %c0_i32 = arith.constant 0 : i32
    %c0_i32_0 = arith.constant 0 : i32
    return %arg0, %c0_i32 : i32, i32
  }
  func.func @transform_4(%arg0: i32) -> (i32, i32) {
    %c0_i32 = arith.constant 0 : i32
    %c0_i32_0 = arith.constant 0 : i32
    %c0_i32_1 = arith.constant 0 : i32
    return %c0_i32, %c0_i32_0 : i32, i32
  }
  func.func @transform_5(%arg0: i32) -> (i32, i32) {
    %c0_i32 = arith.constant 0 : i32
    %c0_i32_0 = arith.constant 0 : i32
    %c0_i32_1 = arith.constant 0 : i32
    return %c0_i32, %c0_i32_0 : i32, i32
  }
  func.func @transform_6(%arg0: i32) -> (i32, i32) {
    %c0_i32 = arith.constant 0 : i32
    %c0_i32_0 = arith.constant 0 : i32
    return %arg0, %c0_i32 : i32, i32
  }
}

module attributes {stable_mosaic.version = 11 : i64} {
  func.func @_bnrelu_conv_stats_kernel(%arg0: i32, %arg1: memref<16x384xf32, #tpu.memory_space<vmem>>, %arg2: memref<16x2xf32, #tpu.memory_space<vmem>>, %arg3: memref<1x384xf32, #tpu.memory_space<vmem>>, %arg4: memref<1x384xf32, #tpu.memory_space<vmem>>, %arg5: memref<384x128xf32, #tpu.memory_space<vmem>>, %arg6: memref<16x128xf32, #tpu.memory_space<vmem>>, %arg7: memref<2x128xf32, #tpu.memory_space<vmem>>, %arg8: memref<1x128xf32, #tpu.memory_space<vmem>>, %arg9: memref<1x128xf32, #tpu.memory_space<vmem>>) attributes {dimension_semantics = [#tpu.dimension_semantics<arbitrary>], iteration_bounds = array<i64: 1>, scalar_prefetch = 0 : i64, scratch_operands = 2 : i64, tpu.core_type = #tpu.core_type<tc>, window_params = [{transform_indices = @transform_0, window_bounds = array<i64: 16, 384>}, {transform_indices = @transform_1, window_bounds = array<i64: 16, 2>}, {pipeline_mode = #tpu.pipeline_mode<synchronous>, transform_indices = @transform_2, window_bounds = array<i64: 1, 384>}, {pipeline_mode = #tpu.pipeline_mode<synchronous>, transform_indices = @transform_3, window_bounds = array<i64: 1, 384>}, {pipeline_mode = #tpu.pipeline_mode<synchronous>, transform_indices = @transform_4, window_bounds = array<i64: 384, 128>}, {transform_indices = @transform_5, window_bounds = array<i64: 16, 128>}, {pipeline_mode = #tpu.pipeline_mode<synchronous>, transform_indices = @transform_6, window_bounds = array<i64: 2, 128>}]} {
    %c0_i32 = arith.constant 0 : i32
    %0 = arith.cmpi eq, %arg0, %c0_i32 : i32
    %1 = arith.extui %0 : i1 to i32
    %c0_i32_0 = arith.constant 0 : i32
    %2 = arith.cmpi ne, %1, %c0_i32_0 : i32
    scf.if %2 {
      %cst_38 = arith.constant 0.000000e+00 : f32
      %80 = vector.broadcast %cst_38 : f32 to vector<1x128xf32>
      %c0_39 = arith.constant 0 : index
      %c0_40 = arith.constant 0 : index
      %81 = vector.load %arg8[%c0_39, %c0_40] : memref<1x128xf32, #tpu.memory_space<vmem>>, vector<1x128xf32>
      tpu.vector_store %arg8[%c0_39, %c0_40], %80 {strides = array<i32>} : memref<1x128xf32, #tpu.memory_space<vmem>>, vector<1x128xf32>,
      %cst_41 = arith.constant 0.000000e+00 : f32
      %82 = vector.broadcast %cst_41 : f32 to vector<1x128xf32>
      %c0_42 = arith.constant 0 : index
      %c0_43 = arith.constant 0 : index
      %83 = vector.load %arg9[%c0_42, %c0_43] : memref<1x128xf32, #tpu.memory_space<vmem>>, vector<1x128xf32>
      tpu.vector_store %arg9[%c0_42, %c0_43], %82 {strides = array<i32>} : memref<1x128xf32, #tpu.memory_space<vmem>>, vector<1x128xf32>,
    } else {
    }
    %c0 = arith.constant 0 : index
    %c0_1 = arith.constant 0 : index
    %3 = vector.load %arg1[%c0, %c0_1] : memref<16x384xf32, #tpu.memory_space<vmem>>, vector<16x384xf32>
    %c0_2 = arith.constant 0 : index
    %c0_3 = arith.constant 0 : index
    %4 = vector.load %arg3[%c0_2, %c0_3] : memref<1x384xf32, #tpu.memory_space<vmem>>, vector<1x384xf32>
    %5 = vector.broadcast %4 : vector<1x384xf32> to vector<16x384xf32>
    %6 = arith.mulf %3, %5 : vector<16x384xf32>
    %c0_4 = arith.constant 0 : index
    %c0_5 = arith.constant 0 : index
    %7 = vector.load %arg4[%c0_4, %c0_5] : memref<1x384xf32, #tpu.memory_space<vmem>>, vector<1x384xf32>
    %8 = vector.broadcast %7 : vector<1x384xf32> to vector<16x384xf32>
    %9 = arith.addf %6, %8 : vector<16x384xf32>
    %cst = arith.constant 0.000000e+00 : f32
    %10 = vector.broadcast %cst : f32 to vector<16x384xf32>
    %11 = arith.maximumf %9, %10 : vector<16x384xf32>
    %c0_6 = arith.constant 0 : index
    %c0_7 = arith.constant 0 : index
    %12 = vector.load %arg2[%c0_6, %c0_7] : memref<16x2xf32, #tpu.memory_space<vmem>>, vector<16x1xf32>
    %c0_8 = arith.constant 0 : index
    %c1 = arith.constant 1 : index
    %13 = vector.load %arg2[%c0_8, %c1] : memref<16x2xf32, #tpu.memory_space<vmem>>, vector<16x1xf32>
    %cst_9 = arith.constant 0.000000e+00 : f32
    %14 = vector.broadcast %cst_9 : f32 to vector<16x128xf32>
    %15 = vector.extract_strided_slice %11 {offsets = [0, 0], sizes = [16, 128], strides = [1, 1]} : vector<16x384xf32> to vector<16x128xf32>
    %16 = vector.broadcast %12 : vector<16x1xf32> to vector<16x128xf32>
    %17 = arith.mulf %15, %16 : vector<16x128xf32>
    %c0_10 = arith.constant 0 : index
    %c0_11 = arith.constant 0 : index
    %18 = vector.load %arg5[%c0_10, %c0_11] : memref<384x128xf32, #tpu.memory_space<vmem>>, vector<128x128xf32>
    %cst_12 = arith.constant dense<0.000000e+00> : vector<16x128xf32>
    %19 = tpu.matmul %17, %18, %cst_12 {dimension_numbers = #tpu.dot_dimension_numbers<[1], [0], [0], [1], [0, 0, 1, 1], [], []>} : vector<16x128xf32>, vector<128x128xf32>, vector<16x128xf32> -> vector<16x128xf32>
    %20 = arith.addf %14, %19 : vector<16x128xf32>
    %21 = vector.extract_strided_slice %11 {offsets = [0, 128], sizes = [16, 128], strides = [1, 1]} : vector<16x384xf32> to vector<16x128xf32>
    %c128 = arith.constant 128 : index
    %c0_13 = arith.constant 0 : index
    %22 = vector.load %arg5[%c128, %c0_13] : memref<384x128xf32, #tpu.memory_space<vmem>>, vector<128x128xf32>
    %cst_14 = arith.constant dense<0.000000e+00> : vector<16x128xf32>
    %23 = tpu.matmul %21, %22, %cst_14 {dimension_numbers = #tpu.dot_dimension_numbers<[1], [0], [0], [1], [0, 0, 1, 1], [], []>} : vector<16x128xf32>, vector<128x128xf32>, vector<16x128xf32> -> vector<16x128xf32>
    %24 = arith.addf %20, %23 : vector<16x128xf32>
    %25 = vector.extract_strided_slice %11 {offsets = [0, 256], sizes = [16, 128], strides = [1, 1]} : vector<16x384xf32> to vector<16x128xf32>
    %26 = vector.broadcast %13 : vector<16x1xf32> to vector<16x128xf32>
    %27 = arith.mulf %25, %26 : vector<16x128xf32>
    %c256 = arith.constant 256 : index
    %c0_15 = arith.constant 0 : index
    %28 = vector.load %arg5[%c256, %c0_15] : memref<384x128xf32, #tpu.memory_space<vmem>>, vector<128x128xf32>
    %cst_16 = arith.constant dense<0.000000e+00> : vector<16x128xf32>
    %29 = tpu.matmul %27, %28, %cst_16 {dimension_numbers = #tpu.dot_dimension_numbers<[1], [0], [0], [1], [0, 0, 1, 1], [], []>} : vector<16x128xf32>, vector<128x128xf32>, vector<16x128xf32> -> vector<16x128xf32>
    %30 = arith.addf %24, %29 : vector<16x128xf32>
    %c0_17 = arith.constant 0 : index
    %c0_18 = arith.constant 0 : index
    %31 = vector.load %arg6[%c0_17, %c0_18] : memref<16x128xf32, #tpu.memory_space<vmem>>, vector<16x128xf32>
    tpu.vector_store %arg6[%c0_17, %c0_18], %30 {strides = array<i32>} : memref<16x128xf32, #tpu.memory_space<vmem>>, vector<16x128xf32>,
    %c16_i32 = arith.constant 16 : i32
    %32 = arith.muli %arg0, %c16_i32 : i32
    %33 = tpu.iota {dimensions = array<i32: 0>} : vector<16x1xi32>
    %34 = vector.broadcast %32 : i32 to vector<16x1xi32>
    %35 = arith.addi %34, %33 : vector<16x1xi32>
    %c16_i32_19 = arith.constant 16 : i32
    %36 = vector.broadcast %c16_i32_19 : i32 to vector<16x1xi32>
    %37 = arith.cmpi slt, %35, %36 : vector<16x1xi32>
    %38 = arith.extui %37 : vector<16x1xi1> to vector<16x1xi32>
    %39 = arith.sitofp %38 : vector<16x1xi32> to vector<16x1xf32>
    %c16_i32_20 = arith.constant 16 : i32
    %40 = arith.subi %c16_i32_20, %32 : i32
    %c16_i32_21 = arith.constant 16 : i32
    %41 = arith.minsi %40, %c16_i32_21 : i32
    %42 = arith.sitofp %41 : i32 to f32
    %c16_i32_22 = arith.constant 16 : i32
    %43 = arith.minsi %32, %c16_i32_22 : i32
    %44 = arith.sitofp %43 : i32 to f32
    %45 = vector.broadcast %39 : vector<16x1xf32> to vector<16x128xf32>
    %46 = arith.mulf %30, %45 : vector<16x128xf32>
    %cst_23 = arith.constant dense<0.000000e+00> : vector<128xf32>
    %47 = vector.multi_reduction <add>, %46, %cst_23 [0] : vector<16x128xf32> to vector<128xf32>
    %48 = vector.shape_cast %47 : vector<128xf32> to vector<1x128xf32>
    %cst_24 = arith.constant 1.000000e+00 : f32
    %49 = arith.divf %cst_24, %42 : f32
    %50 = vector.broadcast %49 : f32 to vector<1x128xf32>
    %51 = arith.mulf %48, %50 : vector<1x128xf32>
    %52 = vector.broadcast %51 : vector<1x128xf32> to vector<16x128xf32>
    %53 = arith.subf %30, %52 : vector<16x128xf32>
    %54 = vector.broadcast %39 : vector<16x1xf32> to vector<16x128xf32>
    %55 = arith.mulf %53, %54 : vector<16x128xf32>
    %56 = arith.mulf %55, %55 : vector<16x128xf32>
    %cst_25 = arith.constant dense<0.000000e+00> : vector<128xf32>
    %57 = vector.multi_reduction <add>, %56, %cst_25 [0] : vector<16x128xf32> to vector<128xf32>
    %58 = vector.shape_cast %57 : vector<128xf32> to vector<1x128xf32>
    %59 = arith.addf %44, %42 : f32
    %c0_26 = arith.constant 0 : index
    %c0_27 = arith.constant 0 : index
    %60 = vector.load %arg8[%c0_26, %c0_27] : memref<1x128xf32, #tpu.memory_space<vmem>>, vector<1x128xf32>
    %61 = arith.subf %51, %60 : vector<1x128xf32>
    %c0_28 = arith.constant 0 : index
    %c0_29 = arith.constant 0 : index
    %62 = vector.load %arg8[%c0_28, %c0_29] : memref<1x128xf32, #tpu.memory_space<vmem>>, vector<1x128xf32>
    %63 = arith.divf %42, %59 : f32
    %64 = vector.broadcast %63 : f32 to vector<1x128xf32>
    %65 = arith.mulf %61, %64 : vector<1x128xf32>
    %66 = arith.addf %62, %65 : vector<1x128xf32>
    %c0_30 = arith.constant 0 : index
    %c0_31 = arith.constant 0 : index
    %67 = vector.load %arg8[%c0_30, %c0_31] : memref<1x128xf32, #tpu.memory_space<vmem>>, vector<1x128xf32>
    tpu.vector_store %arg8[%c0_30, %c0_31], %66 {strides = array<i32>} : memref<1x128xf32, #tpu.memory_space<vmem>>, vector<1x128xf32>,
    %c0_32 = arith.constant 0 : index
    %c0_33 = arith.constant 0 : index
    %68 = vector.load %arg9[%c0_32, %c0_33] : memref<1x128xf32, #tpu.memory_space<vmem>>, vector<1x128xf32>
    %69 = arith.addf %68, %58 : vector<1x128xf32>
    %70 = arith.mulf %61, %61 : vector<1x128xf32>
    %71 = arith.mulf %44, %42 : f32
    %72 = arith.divf %71, %59 : f32
    %73 = vector.broadcast %72 : f32 to vector<1x128xf32>
    %74 = arith.mulf %70, %73 : vector<1x128xf32>
    %75 = arith.addf %69, %74 : vector<1x128xf32>
    %c0_34 = arith.constant 0 : index
    %c0_35 = arith.constant 0 : index
    %76 = vector.load %arg9[%c0_34, %c0_35] : memref<1x128xf32, #tpu.memory_space<vmem>>, vector<1x128xf32>
    tpu.vector_store %arg9[%c0_34, %c0_35], %75 {strides = array<i32>} : memref<1x128xf32, #tpu.memory_space<vmem>>, vector<1x128xf32>,
    %c0_i32_36 = arith.constant 0 : i32
    %77 = arith.cmpi eq, %arg0, %c0_i32_36 : i32
    %78 = arith.extui %77 : i1 to i32
    %c0_i32_37 = arith.constant 0 : i32
    %79 = arith.cmpi ne, %78, %c0_i32_37 : i32
    scf.if %79 {
      %c0_38 = arith.constant 0 : index
      %c0_39 = arith.constant 0 : index
      %80 = vector.load %arg8[%c0_38, %c0_39] : memref<1x128xf32, #tpu.memory_space<vmem>>, vector<1x128xf32>
      %c0_40 = arith.constant 0 : index
      %c0_41 = arith.constant 0 : index
      %81 = vector.load %arg7[%c0_40, %c0_41] : memref<2x128xf32, #tpu.memory_space<vmem>>, vector<1x128xf32>
      tpu.vector_store %arg7[%c0_40, %c0_41], %80 {strides = array<i32>} : memref<2x128xf32, #tpu.memory_space<vmem>>, vector<1x128xf32>,
      %c0_42 = arith.constant 0 : index
      %c0_43 = arith.constant 0 : index
      %82 = vector.load %arg9[%c0_42, %c0_43] : memref<1x128xf32, #tpu.memory_space<vmem>>, vector<1x128xf32>
      %cst_44 = arith.constant 6.250000e-02 : f32
      %83 = vector.broadcast %cst_44 : f32 to vector<1x128xf32>
      %84 = arith.mulf %82, %83 : vector<1x128xf32>
      %c1_45 = arith.constant 1 : index
      %c0_46 = arith.constant 0 : index
      %85 = vector.load %arg7[%c1_45, %c0_46] : memref<2x128xf32, #tpu.memory_space<vmem>>, vector<1x128xf32>
      tpu.vector_store %arg7[%c1_45, %c0_46], %84 {strides = array<i32>} : memref<2x128xf32, #tpu.memory_space<vmem>>, vector<1x128xf32>,
    } else {
    }
    return
  }
  func.func @transform_0(%arg0: i32) -> (i32, i32) {
    %c0_i32 = arith.constant 0 : i32
    %c0_i32_0 = arith.constant 0 : i32
    return %arg0, %c0_i32 : i32, i32
  }
  func.func @transform_1(%arg0: i32) -> (i32, i32) {
    %c0_i32 = arith.constant 0 : i32
    %c0_i32_0 = arith.constant 0 : i32
    return %arg0, %c0_i32 : i32, i32
  }
  func.func @transform_2(%arg0: i32) -> (i32, i32) {
    %c0_i32 = arith.constant 0 : i32
    %c0_i32_0 = arith.constant 0 : i32
    %c0_i32_1 = arith.constant 0 : i32
    return %c0_i32, %c0_i32_0 : i32, i32
  }
  func.func @transform_3(%arg0: i32) -> (i32, i32) {
    %c0_i32 = arith.constant 0 : i32
    %c0_i32_0 = arith.constant 0 : i32
    %c0_i32_1 = arith.constant 0 : i32
    return %c0_i32, %c0_i32_0 : i32, i32
  }
  func.func @transform_4(%arg0: i32) -> (i32, i32) {
    %c0_i32 = arith.constant 0 : i32
    %c0_i32_0 = arith.constant 0 : i32
    %c0_i32_1 = arith.constant 0 : i32
    return %c0_i32, %c0_i32_0 : i32, i32
  }
  func.func @transform_5(%arg0: i32) -> (i32, i32) {
    %c0_i32 = arith.constant 0 : i32
    %c0_i32_0 = arith.constant 0 : i32
    return %arg0, %c0_i32 : i32, i32
  }
  func.func @transform_6(%arg0: i32) -> (i32, i32) {
    %c0_i32 = arith.constant 0 : i32
    %c0_i32_0 = arith.constant 0 : i32
    %c0_i32_1 = arith.constant 0 : i32
    return %c0_i32, %c0_i32_0 : i32, i32
  }
}

</mosaic_0001>

<llo_original>
// kernel: basic_block_forward.5
$region0: #{basic_block_forward.5}
  #allocation0 [shape = 'u32[]', space=smem, size = 0x4, offset = 0x4, fixed_abs, tag = 'smem constant byte address 0x4 - core index']
  #allocation1 [shape = 'u32[144,128]{1,0:T(1,128)}', space=vmem, size = 0x12000, scoped, tag = 'internal scratch']
  %s0 = inlined_call_operand.vmem [shape: f32[16,128], index: 0, kind: input, shape index: {}]
  %s1 = inlined_call_operand.vmem [shape: f32[1,128], index: 1, kind: input, shape index: {}]
  %s2 = inlined_call_operand.vmem [shape: f32[1,128], index: 2, kind: input, shape index: {}]
  %s3 = inlined_call_operand.vmem [shape: f32[16,128], index: 3, kind: input, shape index: {}]
  %s4 = inlined_call_operand.vmem [shape: f32[1,128], index: 4, kind: input, shape index: {}]
  %s5 = inlined_call_operand.vmem [shape: f32[1,128], index: 5, kind: input, shape index: {}]
  %s6 = inlined_call_operand.vmem [shape: f32[16,128], index: 6, kind: output, shape index: {}]
  %s7 = sld [smem:[#allocation0]]
  $region34: #{basic_block_forward.5} parent=0
    _
  %s9 = ssub.s32 1, %s7
  %s10 = scalar_select 0, %s9, %s7
  // Predicated region
  $region2: #{basic_block_forward.5} parent=0 // pred_check
    _
  $region3: #{basic_block_forward.5} parent=0 // pred_check_branch
    %12 = sbr.rel (0) target = $region5
  $region4: #{basic_block_forward.5} parent=0 // pred_region
    _
  $region5: #{basic_block_forward.5} parent=0 // pred_fallthru
    _
  // Predicated region
  $region6: #{basic_block_forward.5} parent=0 // pred_check
    _
  $region7: #{basic_block_forward.5} parent=0 // pred_check_branch
    %14 = sbr.rel (0) target = $region9
  $region8: #{basic_block_forward.5} parent=0 // pred_region
    _
  $region9: #{basic_block_forward.5} parent=0 // pred_fallthru
    _
  // Predicated region
  $region10: #{basic_block_forward.5} parent=0 // pred_check
    _
  $region11: #{basic_block_forward.5} parent=0 // pred_check_branch
    %16 = sbr.rel (0) target = $region13
  $region12: #{basic_block_forward.5} parent=0 // pred_region
    _
  $region13: #{basic_block_forward.5} parent=0 // pred_fallthru
    _
  // Predicated region
  $region14: #{basic_block_forward.5} parent=0 // pred_check
    _
  $region15: #{basic_block_forward.5} parent=0 // pred_check_branch
    %18 = sbr.rel (0) target = $region17
  $region16: #{basic_block_forward.5} parent=0 // pred_region
    _
  $region17: #{basic_block_forward.5} parent=0 // pred_fallthru
    _
  // Predicated region
  $region18: #{basic_block_forward.5} parent=0 // pred_check
    _
  $region19: #{basic_block_forward.5} parent=0 // pred_check_branch
    %20 = sbr.rel (0) target = $region21
  $region20: #{basic_block_forward.5} parent=0 // pred_region
    _
  $region21: #{basic_block_forward.5} parent=0 // pred_fallthru
    _
  // Predicated region
  $region22: #{basic_block_forward.5} parent=0 // pred_check
    _
  $region23: #{basic_block_forward.5} parent=0 // pred_check_branch
    %22 = sbr.rel (0) target = $region25
  $region24: #{basic_block_forward.5} parent=0 // pred_region
    _
  $region25: #{basic_block_forward.5} parent=0 // pred_fallthru
    _
  %v23 = vld [vmem:[%s0] sm:$0xff]
  %v24 = vld [vmem:[%s0 + $0x8] sm:$0xff]
  %v25 = vld [vmem:[%s1] sm:$0x1]
  %v27 = vlaneseq
  %v28 = vshrl.u32 %v27, 7
  %v29 = vsub.s32 0, %v28
  %v30 = vrot.slane %v25, %v29
  %v32 = vmul.f32 %v23, %v30
  %v33 = vmul.f32 %v24, %v30
  %v34 = vld [vmem:[%s2] sm:$0x1]
  %v36 = vlaneseq
  %v37 = vshrl.u32 %v36, 7
  %v38 = vsub.s32 0, %v37
  %v39 = vrot.slane %v34, %v38
  %v41 = vadd.f32 %v32, %v39
  %v42 = vadd.f32 %v33, %v39
  %v43 = vld [vmem:[%s3] sm:$0xff]
  %v44 = vld [vmem:[%s3 + $0x8] sm:$0xff]
  %v45 = vld [vmem:[%s4] sm:$0x1]
  %v47 = vlaneseq
  %v48 = vshrl.u32 %v47, 7
  %v49 = vsub.s32 0, %v48
  %v50 = vrot.slane %v45, %v49
  %v52 = vmul.f32 %v43, %v50
  %v53 = vmul.f32 %v44, %v50
  %v54 = vadd.f32 %v41, %v52
  %v55 = vadd.f32 %v42, %v53
  %v56 = vld [vmem:[%s5] sm:$0x1]
  %v58 = vlaneseq
  %v59 = vshrl.u32 %v58, 7
  %v60 = vsub.s32 0, %v59
  %v61 = vrot.slane %v56, %v60
  %v63 = vadd.f32 %v54, %v61
  %v64 = vadd.f32 %v55, %v61
  %v65 = vmax.f32 %v63, 0.0
  %v66 = vmax.f32 %v64, 0.0
  %67 = vst [vmem:[%s6] sm:$0xff] %v65
  %68 = vst [vmem:[%s6 + $0x8] sm:$0xff] %v66
  // Predicated region
  $region26: #{basic_block_forward.5} parent=0 // pred_check
    _
  $region27: #{basic_block_forward.5} parent=0 // pred_check_branch
    %70 = sbr.rel (0) target = $region29
  $region28: #{basic_block_forward.5} parent=0 // pred_region
    _
  $region29: #{basic_block_forward.5} parent=0 // pred_fallthru
    _
  // Predicated region
  $region30: #{basic_block_forward.5} parent=0 // pred_check
    _
  $region31: #{basic_block_forward.5} parent=0 // pred_check_branch
    %72 = sbr.rel (0) target = $region33
  $region32: #{basic_block_forward.5} parent=0 // pred_region
    _
  $region33: #{basic_block_forward.5} parent=0 // pred_fallthru
    _

// kernel: basic_block_forward.4
$region0: #{basic_block_forward.4}
  #allocation0 [shape = 'u32[]', space=smem, size = 0x4, offset = 0x4, fixed_abs, tag = 'smem constant byte address 0x4 - core index']
  #allocation1 [shape = 'u32[144,128]{1,0:T(1,128)}', space=vmem, size = 0x12000, scoped, tag = 'internal scratch']
  #allocation2 [shape = 'f32[1,128]{1,0:T(1,128)}', space=vmem, size = 0x200, scoped, tag = 'scratch operand']
  #allocation3 [shape = 'f32[1,128]{1,0:T(1,128)}', space=vmem, size = 0x200, scoped, tag = 'scratch operand']
  %s0 = inlined_call_operand.vmem [shape: f32[16,384], index: 0, kind: input, shape index: {}]
  %s1 = inlined_call_operand.vmem [shape: f32[16,2], index: 1, kind: input, shape index: {}]
  %s2 = inlined_call_operand.vmem [shape: f32[1,384], index: 2, kind: input, shape index: {}]
  %s3 = inlined_call_operand.vmem [shape: f32[1,384], index: 3, kind: input, shape index: {}]
  %s4 = inlined_call_operand.vmem [shape: f32[384,128], index: 4, kind: input, shape index: {}]
  %s5 = inlined_call_operand.vmem [shape: f32[16,128], index: 5, kind: output, shape index: {0}]
  %s6 = inlined_call_operand.vmem [shape: f32[2,128], index: 6, kind: output, shape index: {1}]
  %7 = xla_tuple %s5, %s6
  %s8 = sld [smem:[#allocation0]]
  $region46: #{basic_block_forward.4} parent=0
    _
  %s10 = ssub.s32 1, %s8
  %s11 = scalar_select 0, %s10, %s8
  // Predicated region
  $region2: #{basic_block_forward.4} parent=0 // pred_check
    _
  $region3: #{basic_block_forward.4} parent=0 // pred_check_branch
    %13 = sbr.rel (0) target = $region5
  $region4: #{basic_block_forward.4} parent=0 // pred_region
    _
  $region5: #{basic_block_forward.4} parent=0 // pred_fallthru
    _
  // Predicated region
  $region6: #{basic_block_forward.4} parent=0 // pred_check
    _
  $region7: #{basic_block_forward.4} parent=0 // pred_check_branch
    %15 = sbr.rel (0) target = $region9
  $region8: #{basic_block_forward.4} parent=0 // pred_region
    _
  $region9: #{basic_block_forward.4} parent=0 // pred_fallthru
    _
  // Predicated region
  $region10: #{basic_block_forward.4} parent=0 // pred_check
    _
  $region11: #{basic_block_forward.4} parent=0 // pred_check_branch
    %17 = sbr.rel (0) target = $region13
  $region12: #{basic_block_forward.4} parent=0 // pred_region
    _
  $region13: #{basic_block_forward.4} parent=0 // pred_fallthru
    _
  // Predicated region
  $region14: #{basic_block_forward.4} parent=0 // pred_check
    _
  $region15: #{basic_block_forward.4} parent=0 // pred_check_branch
    %19 = sbr.rel (0) target = $region17
  $region16: #{basic_block_forward.4} parent=0 // pred_region
    _
  $region17: #{basic_block_forward.4} parent=0 // pred_fallthru
    _
  // Predicated region
  $region18: #{basic_block_forward.4} parent=0 // pred_check
    _
  $region19: #{basic_block_forward.4} parent=0 // pred_check_branch
    %21 = sbr.rel (0) target = $region21
  $region20: #{basic_block_forward.4} parent=0 // pred_region
    _
  $region21: #{basic_block_forward.4} parent=0 // pred_fallthru
    _
  %p22 = scmp.eq.s32.totalorder 0, 0
  // Predicated region
  $region22: #{basic_block_forward.4} parent=0 // pred_check
    %p23 = pneg %p22
  $region23: #{basic_block_forward.4} parent=0 // pred_check_branch
    %25 = sbr.rel (%p23) target = $region25
  $region24: #{basic_block_forward.4} parent=0 // pred_region
    %26 = vst [vmem:[#allocation2] sm:$0x1] 0.0
    %27 = vst [vmem:[#allocation3] sm:$0x1] 0.0
  $region25: #{basic_block_forward.4} parent=0 // pred_fallthru
    _
  %v28 = vld [vmem:[%s0] sm:$0xff]
  %v29 = vld [vmem:[%s0 + $0x8] sm:$0xff]
  %v30 = vld [vmem:[%s0 + $0x10] sm:$0xff]
  %v31 = vld [vmem:[%s0 + $0x18] sm:$0xff]
  %v32 = vld [vmem:[%s0 + $0x20] sm:$0xff]
  %v33 = vld [vmem:[%s0 + $0x28] sm:$0xff]
  %v34 = vld [vmem:[%s2] sm:$0x7]
  %v36 = vlaneseq
  %v37 = vshrl.u32 %v36, 7
  %v38 = vsub.s32 0, %v37
  %v39 = vrot.slane %v34, %v38
  %v40 = vlaneseq
  %v41 = vshrl.u32 %v40, 7
  %v42 = vsub.s32 1, %v41
  %v43 = vrot.slane %v34, %v42
  %v44 = vlaneseq
  %v45 = vshrl.u32 %v44, 7
  %v46 = vsub.s32 2, %v45
  %v47 = vrot.slane %v34, %v46
  %v51 = vmul.f32 %v28, %v39
  %v52 = vmul.f32 %v29, %v43
  %v53 = vmul.f32 %v30, %v47
  %v54 = vmul.f32 %v31, %v39
  %v55 = vmul.f32 %v32, %v43
  %v56 = vmul.f32 %v33, %v47
  %v57 = vld [vmem:[%s3] sm:$0x7]
  %v59 = vlaneseq
  %v60 = vshrl.u32 %v59, 7
  %v61 = vsub.s32 0, %v60
  %v62 = vrot.slane %v57, %v61
  %v63 = vlaneseq
  %v64 = vshrl.u32 %v63, 7
  %v65 = vsub.s32 1, %v64
  %v66 = vrot.slane %v57, %v65
  %v67 = vlaneseq
  %v68 = vshrl.u32 %v67, 7
  %v69 = vsub.s32 2, %v68
  %v70 = vrot.slane %v57, %v69
  %v74 = vadd.f32 %v51, %v62
  %v75 = vadd.f32 %v52, %v66
  %v76 = vadd.f32 %v53, %v70
  %v77 = vadd.f32 %v54, %v62
  %v78 = vadd.f32 %v55, %v66
  %v79 = vadd.f32 %v56, %v70
  %v80 = vmax.f32 %v74, 0.0
  %v81 = vmax.f32 %v75, 0.0
  %v82 = vmax.f32 %v76, 0.0
  %v83 = vmax.f32 %v77, 0.0
  %v84 = vmax.f32 %v78, 0.0
  %v85 = vmax.f32 %v79, 0.0
  %v86 = vld [vmem:[%s1] sm:$0xff]
  %v87 = vld [vmem:[%s1 + $0x8] sm:$0xff]
  %89 = vset.pattern.permute.xlu0 0
  %90 = vperm.xlu0 %89, %v86
  %v91 = vpop.permute.xlu0 %90
  %94 = vset.pattern.permute.xlu0 0
  %95 = vperm.xlu0 %94, %v87
  %v96 = vpop.permute.xlu0 %95
  %v98 = vmul.f32 %v80, %v91
  %v99 = vmul.f32 %v83, %v96
  %v100 = vld [vmem:[%s4] sm:$0xff]
  %v101 = vld [vmem:[%s4 + $0x8] sm:$0xff]
  %v102 = vld [vmem:[%s4 + $0x10] sm:$0xff]
  %v103 = vld [vmem:[%s4 + $0x18] sm:$0xff]
  %v104 = vld [vmem:[%s4 + $0x20] sm:$0xff]
  %v105 = vld [vmem:[%s4 + $0x28] sm:$0xff]
  %v106 = vld [vmem:[%s4 + $0x30] sm:$0xff]
  %v107 = vld [vmem:[%s4 + $0x38] sm:$0xff]
  %v108 = vld [vmem:[%s4 + $0x40] sm:$0xff]
  %v109 = vld [vmem:[%s4 + $0x48] sm:$0xff]
  %v110 = vld [vmem:[%s4 + $0x50] sm:$0xff]
  %v111 = vld [vmem:[%s4 + $0x58] sm:$0xff]
  %v112 = vld [vmem:[%s4 + $0x60] sm:$0xff]
  %v113 = vld [vmem:[%s4 + $0x68] sm:$0xff]
  %v114 = vld [vmem:[%s4 + $0x70] sm:$0xff]
  %v115 = vld [vmem:[%s4 + $0x78] sm:$0xff]
  %v116 = vld [vmem:[%s4 + $0x80] sm:$0xff]
  %v117 = vld [vmem:[%s4 + $0x88] sm:$0xff]
  %v118 = vld [vmem:[%s4 + $0x90] sm:$0xff]
  %v119 = vld [vmem:[%s4 + $0x98] sm:$0xff]
  %v120 = vld [vmem:[%s4 + $0xa0] sm:$0xff]
  %v121 = vld [vmem:[%s4 + $0xa8] sm:$0xff]
  %v122 = vld [vmem:[%s4 + $0xb0] sm:$0xff]
  %v123 = vld [vmem:[%s4 + $0xb8] sm:$0xff]
  %v124 = vld [vmem:[%s4 + $0xc0] sm:$0xff]
  %v125 = vld [vmem:[%s4 + $0xc8] sm:$0xff]
  %v126 = vld [vmem:[%s4 + $0xd0] sm:$0xff]
  %v127 = vld [vmem:[%s4 + $0xd8] sm:$0xff]
  %v128 = vld [vmem:[%s4 + $0xe0] sm:$0xff]
  %v129 = vld [vmem:[%s4 + $0xe8] sm:$0xff]
  %v130 = vld [vmem:[%s4 + $0xf0] sm:$0xff]
  %v131 = vld [vmem:[%s4 + $0xf8] sm:$0xff]
  %132 = vmatprep.subr.mxu0 0.0
  %133 = vmatpush1.msra.mxu0 %v131
  %134 = vmatprep.subr.mxu0 0.0
  %135 = vmatpush1.msra.mxu0 %v130
  %136 = vmatprep.subr.mxu0 0.0
  %137 = vmatpush1.msra.mxu0 %v129
  %138 = vmatprep.subr.mxu0 0.0
  %139 = vmatpush1.msra.mxu0 %v128
  %140 = vmatprep.subr.mxu0 0.0
  %141 = vmatpush1.msra.mxu0 %v127
  %142 = vmatprep.subr.mxu0 0.0
  %143 = vmatpush1.msra.mxu0 %v126
  %144 = vmatprep.subr.mxu0 0.0
  %145 = vmatpush1.msra.mxu0 %v125
  %146 = vmatprep.subr.mxu0 0.0
  %147 = vmatpush1.msra.mxu0 %v124
  %148 = vmatprep.subr.mxu0 0.0
  %149 = vmatpush1.msra.mxu0 %v123
  %150 = vmatprep.subr.mxu0 0.0
  %151 = vmatpush1.msra.mxu0 %v122
  %152 = vmatprep.subr.mxu0 0.0
  %153 = vmatpush1.msra.mxu0 %v121
  %154 = vmatprep.subr.mxu0 0.0
  %155 = vmatpush1.msra.mxu0 %v120
  %156 = vmatprep.subr.mxu0 0.0
  %157 = vmatpush1.msra.mxu0 %v119
  %158 = vmatprep.subr.mxu0 0.0
  %159 = vmatpush1.msra.mxu0 %v118
  %160 = vmatprep.subr.mxu0 0.0
  %161 = vmatpush1.msra.mxu0 %v117
  %162 = vmatprep.subr.mxu0 0.0
  %163 = vmatpush1.msra.mxu0 %v116
  %164 = vmatprep.subr.mxu0 0.0
  %165 = vmatpush2.msra.mxu0 0.0
  %166 = vmatprep.subr.mxu0 0.0
  %167 = vmatpush2.msra.mxu0 0.0
  %168 = vmatprep.subr.mxu0 0.0
  %169 = vmatpush2.msra.mxu0 0.0
  %170 = vmatprep.subr.mxu0 0.0
  %171 = vmatpush2.msra.mxu0 0.0
  %172 = vmatprep.subr.mxu0 0.0
  %173 = vmatpush2.msra.mxu0 0.0
  %174 = vmatprep.subr.mxu0 0.0
  %175 = vmatpush2.msra.mxu0 0.0
  %176 = vmatprep.subr.mxu0 0.0
  %177 = vmatpush2.msra.mxu0 0.0
  %178 = vmatprep.subr.mxu0 0.0
  %179 = vmatpush2.msra.mxu0 0.0
  %180 = vmatprep.subr.mxu0 0.0
  %181 = vmatpush2.msra.mxu0 0.0
  %182 = vmatprep.subr.mxu0 0.0
  %183 = vmatpush2.msra.mxu0 0.0
  %184 = vmatprep.subr.mxu0 0.0
  %185 = vmatpush2.msra.mxu0 0.0
  %186 = vmatprep.subr.mxu0 0.0
  %187 = vmatpush2.msra.mxu0 0.0
  %188 = vmatprep.subr.mxu0 0.0
  %189 = vmatpush2.msra.mxu0 0.0
  %190 = vmatprep.subr.mxu0 0.0
  %191 = vmatpush2.msra.mxu0 0.0
  %192 = vmatprep.subr.mxu0 0.0
  %193 = vmatpush2.msra.mxu0 0.0
  %194 = vmatprep.subr.mxu0 0.0
  %195 = vmatpush2.msra.mxu0 0.0
  %196 = vmatprep.mubr.f32.mxu0 0.0
  %197 = vmatmul.mubr.f32.gmra.mxu0 %v81
  %v198 = vpop.f32.mrf.mxu0
  %v199 = vadd.f32 0.0, %v198
  %v200 = vpop.f32.mrf.mxu0
  %201 = vmatprep.mubr.f32.mxu0 0.0
  %202 = vmatmul.mubr.f32.gmra.mxu0 %v84
  %v203 = vpop.f32.mrf.mxu0
  %v204 = vadd.f32 0.0, %v203
  %v205 = vpop.f32.mrf.mxu0
  %206 = vdwg.mxu0
  %207 = vmatprep.subr.mxu0 0.0
  %208 = vmatpush1.msra.mxu0 %v115
  %209 = vmatprep.subr.mxu0 0.0
  %210 = vmatpush1.msra.mxu0 %v114
  %211 = vmatprep.subr.mxu0 0.0
  %212 = vmatpush1.msra.mxu0 %v113
  %213 = vmatprep.subr.mxu0 0.0
  %214 = vmatpush1.msra.mxu0 %v112
  %215 = vmatprep.subr.mxu0 0.0
  %216 = vmatpush1.msra.mxu0 %v111
  %217 = vmatprep.subr.mxu0 0.0
  %218 = vmatpush1.msra.mxu0 %v110
  %219 = vmatprep.subr.mxu0 0.0
  %220 = vmatpush1.msra.mxu0 %v109
  %221 = vmatprep.subr.mxu0 0.0
  %222 = vmatpush1.msra.mxu0 %v108
  %223 = vmatprep.subr.mxu0 0.0
  %224 = vmatpush1.msra.mxu0 %v107
  %225 = vmatprep.subr.mxu0 0.0
  %226 = vmatpush1.msra.mxu0 %v106
  %227 = vmatprep.subr.mxu0 0.0
  %228 = vmatpush1.msra.mxu0 %v105
  %229 = vmatprep.subr.mxu0 0.0
  %230 = vmatpush1.msra.mxu0 %v104
  %231 = vmatprep.subr.mxu0 0.0
  %232 = vmatpush1.msra.mxu0 %v103
  %233 = vmatprep.subr.mxu0 0.0
  %234 = vmatpush1.msra.mxu0 %v102
  %235 = vmatprep.subr.mxu0 0.0
  %236 = vmatpush1.msra.mxu0 %v101
  %237 = vmatprep.subr.mxu0 0.0
  %238 = vmatpush1.msra.mxu0 %v100
  %239 = vmatprep.subr.mxu0 0.0
  %240 = vmatpush2.msra.mxu0 0.0
  %241 = vmatprep.subr.mxu0 0.0
  %242 = vmatpush2.msra.mxu0 0.0
  %243 = vmatprep.subr.mxu0 0.0
  %244 = vmatpush2.msra.mxu0 0.0
  %245 = vmatprep.subr.mxu0 0.0
  %246 = vmatpush2.msra.mxu0 0.0
  %247 = vmatprep.subr.mxu0 0.0
  %248 = vmatpush2.msra.mxu0 0.0
  %249 = vmatprep.subr.mxu0 0.0
  %250 = vmatpush2.msra.mxu0 0.0
  %251 = vmatprep.subr.mxu0 0.0
  %252 = vmatpush2.msra.mxu0 0.0
  %253 = vmatprep.subr.mxu0 0.0
  %254 = vmatpush2.msra.mxu0 0.0
  %255 = vmatprep.subr.mxu0 0.0
  %256 = vmatpush2.msra.mxu0 0.0
  %257 = vmatprep.subr.mxu0 0.0
  %258 = vmatpush2.msra.mxu0 0.0
  %259 = vmatprep.subr.mxu0 0.0
  %260 = vmatpush2.msra.mxu0 0.0
  %261 = vmatprep.subr.mxu0 0.0
  %262 = vmatpush2.msra.mxu0 0.0
  %263 = vmatprep.subr.mxu0 0.0
  %264 = vmatpush2.msra.mxu0 0.0
  %265 = vmatprep.subr.mxu0 0.0
  %266 = vmatpush2.msra.mxu0 0.0
  %267 = vmatprep.subr.mxu0 0.0
  %268 = vmatpush2.msra.mxu0 0.0
  %269 = vmatprep.subr.mxu0 0.0
  %270 = vmatpush2.msra.mxu0 0.0
  %271 = vmatprep.mubr.f32.mxu0 0.0
  %272 = vmatmul.mubr.f32.gmra.mxu0 %v98
  %v273 = vpop.f32.mrf.mxu0
  %v274 = vadd.f32 %v199, %v273
  %v275 = vpop.f32.mrf.mxu0
  %276 = vmatprep.mubr.f32.mxu0 0.0
  %277 = vmatmul.mubr.f32.gmra.mxu0 %v99
  %v278 = vpop.f32.mrf.mxu0
  %v279 = vadd.f32 %v204, %v278
  %v280 = vpop.f32.mrf.mxu0
  %281 = vdwg.mxu0
  %282 = vset.pattern.permute.xlu0 1
  %283 = vperm.xlu0 %282, %v86
  %v284 = vpop.permute.xlu0 %283
  %286 = vset.pattern.permute.xlu0 1
  %287 = vperm.xlu0 %286, %v87
  %v288 = vpop.permute.xlu0 %287
  %v290 = vmul.f32 %v82, %v284
  %v291 = vmul.f32 %v85, %v288
  %v292 = vld [vmem:[%s4 + $0x100] sm:$0xff]
  %v293 = vld [vmem:[%s4 + $0x108] sm:$0xff]
  %v294 = vld [vmem:[%s4 + $0x110] sm:$0xff]
  %v295 = vld [vmem:[%s4 + $0x118] sm:$0xff]
  %v296 = vld [vmem:[%s4 + $0x120] sm:$0xff]
  %v297 = vld [vmem:[%s4 + $0x128] sm:$0xff]
  %v298 = vld [vmem:[%s4 + $0x130] sm:$0xff]
  %v299 = vld [vmem:[%s4 + $0x138] sm:$0xff]
  %v300 = vld [vmem:[%s4 + $0x140] sm:$0xff]
  %v301 = vld [vmem:[%s4 + $0x148] sm:$0xff]
  %v302 = vld [vmem:[%s4 + $0x150] sm:$0xff]
  %v303 = vld [vmem:[%s4 + $0x158] sm:$0xff]
  %v304 = vld [vmem:[%s4 + $0x160] sm:$0xff]
  %v305 = vld [vmem:[%s4 + $0x168] sm:$0xff]
  %v306 = vld [vmem:[%s4 + $0x170] sm:$0xff]
  %v307 = vld [vmem:[%s4 + $0x178] sm:$0xff]
  %308 = vmatprep.subr.mxu0 0.0
  %309 = vmatpush1.msra.mxu0 %v307
  %310 = vmatprep.subr.mxu0 0.0
  %311 = vmatpush1.msra.mxu0 %v306
  %312 = vmatprep.subr.mxu0 0.0
  %313 = vmatpush1.msra.mxu0 %v305
  %314 = vmatprep.subr.mxu0 0.0
  %315 = vmatpush1.msra.mxu0 %v304
  %316 = vmatprep.subr.mxu0 0.0
  %317 = vmatpush1.msra.mxu0 %v303
  %318 = vmatprep.subr.mxu0 0.0
  %319 = vmatpush1.msra.mxu0 %v302
  %320 = vmatprep.subr.mxu0 0.0
  %321 = vmatpush1.msra.mxu0 %v301
  %322 = vmatprep.subr.mxu0 0.0
  %323 = vmatpush1.msra.mxu0 %v300
  %324 = vmatprep.subr.mxu0 0.0
  %325 = vmatpush1.msra.mxu0 %v299
  %326 = vmatprep.subr.mxu0 0.0
  %327 = vmatpush1.msra.mxu0 %v298
  %328 = vmatprep.subr.mxu0 0.0
  %329 = vmatpush1.msra.mxu0 %v297
  %330 = vmatprep.subr.mxu0 0.0
  %331 = vmatpush1.msra.mxu0 %v296
  %332 = vmatprep.subr.mxu0 0.0
  %333 = vmatpush1.msra.mxu0 %v295
  %334 = vmatprep.subr.mxu0 0.0
  %335 = vmatpush1.msra.mxu0 %v294
  %336 = vmatprep.subr.mxu0 0.0
  %337 = vmatpush1.msra.mxu0 %v293
  %338 = vmatprep.subr.mxu0 0.0
  %339 = vmatpush1.msra.mxu0 %v292
  %340 = vmatprep.subr.mxu0 0.0
  %341 = vmatpush2.msra.mxu0 0.0
  %342 = vmatprep.subr.mxu0 0.0
  %343 = vmatpush2.msra.mxu0 0.0
  %344 = vmatprep.subr.mxu0 0.0
  %345 = vmatpush2.msra.mxu0 0.0
  %346 = vmatprep.subr.mxu0 0.0
  %347 = vmatpush2.msra.mxu0 0.0
  %348 = vmatprep.subr.mxu0 0.0
  %349 = vmatpush2.msra.mxu0 0.0
  %350 = vmatprep.subr.mxu0 0.0
  %351 = vmatpush2.msra.mxu0 0.0
  %352 = vmatprep.subr.mxu0 0.0
  %353 = vmatpush2.msra.mxu0 0.0
  %354 = vmatprep.subr.mxu0 0.0
  %355 = vmatpush2.msra.mxu0 0.0
  %356 = vmatprep.subr.mxu0 0.0
  %357 = vmatpush2.msra.mxu0 0.0
  %358 = vmatprep.subr.mxu0 0.0
  %359 = vmatpush2.msra.mxu0 0.0
  %360 = vmatprep.subr.mxu0 0.0
  %361 = vmatpush2.msra.mxu0 0.0
  %362 = vmatprep.subr.mxu0 0.0
  %363 = vmatpush2.msra.mxu0 0.0
  %364 = vmatprep.subr.mxu0 0.0
  %365 = vmatpush2.msra.mxu0 0.0
  %366 = vmatprep.subr.mxu0 0.0
  %367 = vmatpush2.msra.mxu0 0.0
  %368 = vmatprep.subr.mxu0 0.0
  %369 = vmatpush2.msra.mxu0 0.0
  %370 = vmatprep.subr.mxu0 0.0
  %371 = vmatpush2.msra.mxu0 0.0
  %372 = vmatprep.mubr.f32.mxu0 0.0
  %373 = vmatmul.mubr.f32.gmra.mxu0 %v290
  %v374 = vpop.f32.mrf.mxu0
  %v375 = vadd.f32 0.0, %v374
  %v376 = vpop.f32.mrf.mxu0
  %377 = vmatprep.mubr.f32.mxu0 0.0
  %378 = vmatmul.mubr.f32.gmra.mxu0 %v291
  %v379 = vpop.f32.mrf.mxu0
  %v380 = vadd.f32 0.0, %v379
  %v381 = vpop.f32.mrf.mxu0
  %382 = vdwg.mxu0
  %v383 = vadd.f32 %v274, %v375
  %v384 = vadd.f32 %v279, %v380
  %385 = vst [vmem:[%s5] sm:$0xff] %v383
  %386 = vst [vmem:[%s5 + $0x8] sm:$0xff] %v384
  %s387 = smul.u32 0, 16
  %v388 = vlaneseq
  %v389 = vshrl.u32 %v388, 7
  %v390 = vadd.s32 %v389, 8
  %v391 = vstv %s387
  %v392 = vadd.s32 %v391, %v389
  %v393 = vadd.s32 %v391, %v390
  %vm394 = vcmp.lt.s32.totalorder %v392, 16
  %vm395 = vcmp.lt.s32.totalorder %v393, 16
  %v396 = vsel %vm394, 1, 0
  %v397 = vsel %vm395, 1, 0
  %v398 = vcvt.s32.f32 %v396
  %v399 = vcvt.s32.f32 %v397
  %s400 = ssub.s32 16, %s387
  %p401 = scmp.lt.s32.totalorder %s400, 16
  %s402 = scalar_select %p401, %s400, 16
  %s403 = scvt.s32.f32 %s402
  %p404 = scmp.lt.s32.totalorder %s387, 16
  %s405 = scalar_select %p404, %s387, 16
  %s406 = scvt.s32.f32 %s405
  %v407 = vmul.f32 %v383, %v398
  %v408 = vmul.f32 %v384, %v399
  %v409 = vadd.f32 %v407, %v408
  %v410 = vrot.slane %v409, 4
  %v411 = vadd.f32 %v409, %v410
  %v412 = vrot.slane %v411, 2
  %v413 = vadd.f32 %v411, %v412
  %v414 = vrot.slane %v413, 1
  %v415 = vadd.f32 %v413, %v414
  %v416 = vstv %s403
  %v417 = vrcp.pop %v416
  %s418 = vtos %v417
  %v419 = vstv %s418
  %v420 = vmul.f32 %v415, %v419
  %v421 = vsub.f32 %v383, %v420
  %v422 = vsub.f32 %v384, %v420
  %v423 = vmul.f32 %v421, %v398
  %v424 = vmul.f32 %v422, %v399
  %v425 = vmul.f32 %v423, %v423
  %v426 = vmul.f32 %v424, %v424
  %v427 = vadd.f32 %v425, %v426
  %v428 = vrot.slane %v427, 4
  %v429 = vadd.f32 %v427, %v428
  %v430 = vrot.slane %v429, 2
  %v431 = vadd.f32 %v429, %v430
  %v432 = vrot.slane %v431, 1
  %v433 = vadd.f32 %v431, %v432
  %s434 = sadd.f32 %s406, %s403
  %v435 = vld [vmem:[#allocation2] sm:$0x1]
  %v436 = vsub.f32 %v420, %v435
  %v437 = vstv %s434
  %v438 = vrcp.pop %v437
  %s439 = vtos %v438
  %s440 = smul.f32 %s403, %s439
  %v441 = vstv %s440
  %v442 = vmul.f32 %v436, %v441
  %v443 = vadd.f32 %v435, %v442
  %444 = vst [vmem:[#allocation2] sm:$0x1] %v443
  %v445 = vld [vmem:[#allocation3] sm:$0x1]
  %v446 = vadd.f32 %v445, %v433
  %v447 = vmul.f32 %v436, %v436
  %s448 = smul.f32 %s406, %s403
  %v449 = vstv %s434
  %v450 = vrcp.pop %v449
  %s451 = vtos %v450
  %s452 = smul.f32 %s448, %s451
  %v453 = vstv %s452
  %v454 = vmul.f32 %v447, %v453
  %v455 = vadd.f32 %v446, %v454
  %456 = vst [vmem:[#allocation3] sm:$0x1] %v455
  // Predicated region
  $region26: #{basic_block_forward.4} parent=0 // pred_check
    %p457 = pneg %p22
  $region27: #{basic_block_forward.4} parent=0 // pred_check_branch
    %459 = sbr.rel (%p457) target = $region29
  $region28: #{basic_block_forward.4} parent=0 // pred_region
    %v460 = vld [vmem:[#allocation2] sm:$0x1]
    %461 = vst [vmem:[%s6] sm:$0x1] %v460
    %v462 = vld [vmem:[#allocation3] sm:$0x1]
    %v463 = vmul.f32 %v462, 0.0625
    %464 = vst [vmem:[%s6 + $0x1] sm:$0x1] %v463
  $region29: #{basic_block_forward.4} parent=0 // pred_fallthru
    _
  // Predicated region
  $region30: #{basic_block_forward.4} parent=0 // pred_check
    _
  $region31: #{basic_block_forward.4} parent=0 // pred_check_branch
    %466 = sbr.rel (0) target = $region33
  $region32: #{basic_block_forward.4} parent=0 // pred_region
    _
  $region33: #{basic_block_forward.4} parent=0 // pred_fallthru
    _
  // Predicated region
  $region34: #{basic_block_forward.4} parent=0 // pred_check
    _
  $region35: #{basic_block_forward.4} parent=0 // pred_check_branch
    %468 = sbr.rel (0) target = $region37
  $region36: #{basic_block_forward.4} parent=0 // pred_region
    _
  $region37: #{basic_block_forward.4} parent=0 // pred_fallthru
    _
  // Predicated region
  $region38: #{basic_block_forward.4} parent=0 // pred_check
    _
  $region39: #{basic_block_forward.4} parent=0 // pred_check_branch
    %470 = sbr.rel (0) target = $region41
  $region40: #{basic_block_forward.4} parent=0 // pred_region
    _
  $region41: #{basic_block_forward.4} parent=0 // pred_fallthru
    _
  // Predicated region
  $region42: #{basic_block_forward.4} parent=0 // pred_check
    _
  $region43: #{basic_block_forward.4} parent=0 // pred_check_branch
    %472 = sbr.rel (0) target = $region45
  $region44: #{basic_block_forward.4} parent=0 // pred_region
    _
  $region45: #{basic_block_forward.4} parent=0 // pred_fallthru
    _

// kernel: basic_block_forward.3
$region0: #{basic_block_forward.3}
  #allocation0 [shape = 'u32[]', space=smem, size = 0x4, offset = 0x4, fixed_abs, tag = 'smem constant byte address 0x4 - core index']
  #allocation1 [shape = 'u32[144,128]{1,0:T(1,128)}', space=vmem, size = 0x12000, scoped, tag = 'internal scratch']
  #allocation2 [shape = 'f32[1,128]{1,0:T(1,128)}', space=vmem, size = 0x200, scoped, tag = 'scratch operand']
  #allocation3 [shape = 'f32[1,128]{1,0:T(1,128)}', space=vmem, size = 0x200, scoped, tag = 'scratch operand']
  #allocation4 [shape = 'f32[1,128]{1,0:T(1,128)}', space=vmem, size = 0x200, scoped, tag = 'scratch operand']
  #allocation5 [shape = 'f32[1,128]{1,0:T(1,128)}', space=vmem, size = 0x200, scoped, tag = 'scratch operand']
  %s0 = inlined_call_operand.vmem [shape: f32[16,384], index: 0, kind: input, shape index: {}]
  %s1 = inlined_call_operand.vmem [shape: f32[384,128], index: 1, kind: input, shape index: {}]
  %s2 = inlined_call_operand.vmem [shape: f32[128,128], index: 2, kind: input, shape index: {}]
  %s3 = inlined_call_operand.vmem [shape: f32[16,128], index: 3, kind: output, shape index: {0}]
  %s4 = inlined_call_operand.vmem [shape: f32[16,128], index: 4, kind: output, shape index: {1}]
  %s5 = inlined_call_operand.vmem [shape: f32[2,128], index: 5, kind: output, shape index: {2}]
  %s6 = inlined_call_operand.vmem [shape: f32[2,128], index: 6, kind: output, shape index: {3}]
  %7 = xla_tuple %s3, %s4, %s5, %s6
  %s8 = sld [smem:[#allocation0]]
  $region54: #{basic_block_forward.3} parent=0
    _
  %s10 = ssub.s32 1, %s8
  %s11 = scalar_select 0, %s10, %s8
  // Predicated region
  $region2: #{basic_block_forward.3} parent=0 // pred_check
    _
  $region3: #{basic_block_forward.3} parent=0 // pred_check_branch
    %13 = sbr.rel (0) target = $region5
  $region4: #{basic_block_forward.3} parent=0 // pred_region
    _
  $region5: #{basic_block_forward.3} parent=0 // pred_fallthru
    _
  // Predicated region
  $region6: #{basic_block_forward.3} parent=0 // pred_check
    _
  $region7: #{basic_block_forward.3} parent=0 // pred_check_branch
    %15 = sbr.rel (0) target = $region9
  $region8: #{basic_block_forward.3} parent=0 // pred_region
    _
  $region9: #{basic_block_forward.3} parent=0 // pred_fallthru
    _
  // Predicated region
  $region10: #{basic_block_forward.3} parent=0 // pred_check
    _
  $region11: #{basic_block_forward.3} parent=0 // pred_check_branch
    %17 = sbr.rel (0) target = $region13
  $region12: #{basic_block_forward.3} parent=0 // pred_region
    _
  $region13: #{basic_block_forward.3} parent=0 // pred_fallthru
    _
  %p18 = scmp.eq.s32.totalorder 0, 0
  // Predicated region
  $region14: #{basic_block_forward.3} parent=0 // pred_check
    %p19 = pneg %p18
  $region15: #{basic_block_forward.3} parent=0 // pred_check_branch
    %21 = sbr.rel (%p19) target = $region17
  $region16: #{basic_block_forward.3} parent=0 // pred_region
    %22 = vst [vmem:[#allocation2] sm:$0x1] 0.0
    %23 = vst [vmem:[#allocation3] sm:$0x1] 0.0
    %24 = vst [vmem:[#allocation4] sm:$0x1] 0.0
    %25 = vst [vmem:[#allocation5] sm:$0x1] 0.0
  $region17: #{basic_block_forward.3} parent=0 // pred_fallthru
    _
  %v26 = vld [vmem:[%s0] sm:$0xff]
  %v27 = vld [vmem:[%s0 + $0x8] sm:$0xff]
  %v28 = vld [vmem:[%s0 + $0x10] sm:$0xff]
  %v29 = vld [vmem:[%s0 + $0x18] sm:$0xff]
  %v30 = vld [vmem:[%s0 + $0x20] sm:$0xff]
  %v31 = vld [vmem:[%s0 + $0x28] sm:$0xff]
  %v32 = vld [vmem:[%s1] sm:$0xff]
  %v33 = vld [vmem:[%s1 + $0x8] sm:$0xff]
  %v34 = vld [vmem:[%s1 + $0x10] sm:$0xff]
  %v35 = vld [vmem:[%s1 + $0x18] sm:$0xff]
  %v36 = vld [vmem:[%s1 + $0x20] sm:$0xff]
  %v37 = vld [vmem:[%s1 + $0x28] sm:$0xff]
  %v38 = vld [vmem:[%s1 + $0x30] sm:$0xff]
  %v39 = vld [vmem:[%s1 + $0x38] sm:$0xff]
  %v40 = vld [vmem:[%s1 + $0x40] sm:$0xff]
  %v41 = vld [vmem:[%s1 + $0x48] sm:$0xff]
  %v42 = vld [vmem:[%s1 + $0x50] sm:$0xff]
  %v43 = vld [vmem:[%s1 + $0x58] sm:$0xff]
  %v44 = vld [vmem:[%s1 + $0x60] sm:$0xff]
  %v45 = vld [vmem:[%s1 + $0x68] sm:$0xff]
  %v46 = vld [vmem:[%s1 + $0x70] sm:$0xff]
  %v47 = vld [vmem:[%s1 + $0x78] sm:$0xff]
  %v48 = vld [vmem:[%s1 + $0x80] sm:$0xff]
  %v49 = vld [vmem:[%s1 + $0x88] sm:$0xff]
  %v50 = vld [vmem:[%s1 + $0x90] sm:$0xff]
  %v51 = vld [vmem:[%s1 + $0x98] sm:$0xff]
  %v52 = vld [vmem:[%s1 + $0xa0] sm:$0xff]
  %v53 = vld [vmem:[%s1 + $0xa8] sm:$0xff]
  %v54 = vld [vmem:[%s1 + $0xb0] sm:$0xff]
  %v55 = vld [vmem:[%s1 + $0xb8] sm:$0xff]
  %v56 = vld [vmem:[%s1 + $0xc0] sm:$0xff]
  %v57 = vld [vmem:[%s1 + $0xc8] sm:$0xff]
  %v58 = vld [vmem:[%s1 + $0xd0] sm:$0xff]
  %v59 = vld [vmem:[%s1 + $0xd8] sm:$0xff]
  %v60 = vld [vmem:[%s1 + $0xe0] sm:$0xff]
  %v61 = vld [vmem:[%s1 + $0xe8] sm:$0xff]
  %v62 = vld [vmem:[%s1 + $0xf0] sm:$0xff]
  %v63 = vld [vmem:[%s1 + $0xf8] sm:$0xff]
  %v64 = vld [vmem:[%s1 + $0x100] sm:$0xff]
  %v65 = vld [vmem:[%s1 + $0x108] sm:$0xff]
  %v66 = vld [vmem:[%s1 + $0x110] sm:$0xff]
  %v67 = vld [vmem:[%s1 + $0x118] sm:$0xff]
  %v68 = vld [vmem:[%s1 + $0x120] sm:$0xff]
  %v69 = vld [vmem:[%s1 + $0x128] sm:$0xff]
  %v70 = vld [vmem:[%s1 + $0x130] sm:$0xff]
  %v71 = vld [vmem:[%s1 + $0x138] sm:$0xff]
  %v72 = vld [vmem:[%s1 + $0x140] sm:$0xff]
  %v73 = vld [vmem:[%s1 + $0x148] sm:$0xff]
  %v74 = vld [vmem:[%s1 + $0x150] sm:$0xff]
  %v75 = vld [vmem:[%s1 + $0x158] sm:$0xff]
  %v76 = vld [vmem:[%s1 + $0x160] sm:$0xff]
  %v77 = vld [vmem:[%s1 + $0x168] sm:$0xff]
  %v78 = vld [vmem:[%s1 + $0x170] sm:$0xff]
  %v79 = vld [vmem:[%s1 + $0x178] sm:$0xff]
  %80 = vmatprep.subr.mxu0 0.0
  %81 = vmatpush1.msra.mxu0 %v47
  %82 = vmatprep.subr.mxu0 0.0
  %83 = vmatpush1.msra.mxu0 %v46
  %84 = vmatprep.subr.mxu0 0.0
  %85 = vmatpush1.msra.mxu0 %v45
  %86 = vmatprep.subr.mxu0 0.0
  %87 = vmatpush1.msra.mxu0 %v44
  %88 = vmatprep.subr.mxu0 0.0
  %89 = vmatpush1.msra.mxu0 %v43
  %90 = vmatprep.subr.mxu0 0.0
  %91 = vmatpush1.msra.mxu0 %v42
  %92 = vmatprep.subr.mxu0 0.0
  %93 = vmatpush1.msra.mxu0 %v41
  %94 = vmatprep.subr.mxu0 0.0
  %95 = vmatpush1.msra.mxu0 %v40
  %96 = vmatprep.subr.mxu0 0.0
  %97 = vmatpush1.msra.mxu0 %v39
  %98 = vmatprep.subr.mxu0 0.0
  %99 = vmatpush1.msra.mxu0 %v38
  %100 = vmatprep.subr.mxu0 0.0
  %101 = vmatpush1.msra.mxu0 %v37
  %102 = vmatprep.subr.mxu0 0.0
  %103 = vmatpush1.msra.mxu0 %v36
  %104 = vmatprep.subr.mxu0 0.0
  %105 = vmatpush1.msra.mxu0 %v35
  %106 = vmatprep.subr.mxu0 0.0
  %107 = vmatpush1.msra.mxu0 %v34
  %108 = vmatprep.subr.mxu0 0.0
  %109 = vmatpush1.msra.mxu0 %v33
  %110 = vmatprep.subr.mxu0 0.0
  %111 = vmatpush1.msra.mxu0 %v32
  %112 = vmatprep.subr.mxu0 0.0
  %113 = vmatpush2.msra.mxu0 %v63
  %114 = vmatprep.subr.mxu0 0.0
  %115 = vmatpush2.msra.mxu0 %v62
  %116 = vmatprep.subr.mxu0 0.0
  %117 = vmatpush2.msra.mxu0 %v61
  %118 = vmatprep.subr.mxu0 0.0
  %119 = vmatpush2.msra.mxu0 %v60
  %120 = vmatprep.subr.mxu0 0.0
  %121 = vmatpush2.msra.mxu0 %v59
  %122 = vmatprep.subr.mxu0 0.0
  %123 = vmatpush2.msra.mxu0 %v58
  %124 = vmatprep.subr.mxu0 0.0
  %125 = vmatpush2.msra.mxu0 %v57
  %126 = vmatprep.subr.mxu0 0.0
  %127 = vmatpush2.msra.mxu0 %v56
  %128 = vmatprep.subr.mxu0 0.0
  %129 = vmatpush2.msra.mxu0 %v55
  %130 = vmatprep.subr.mxu0 0.0
  %131 = vmatpush2.msra.mxu0 %v54
  %132 = vmatprep.subr.mxu0 0.0
  %133 = vmatpush2.msra.mxu0 %v53
  %134 = vmatprep.subr.mxu0 0.0
  %135 = vmatpush2.msra.mxu0 %v52
  %136 = vmatprep.subr.mxu0 0.0
  %137 = vmatpush2.msra.mxu0 %v51
  %138 = vmatprep.subr.mxu0 0.0
  %139 = vmatpush2.msra.mxu0 %v50
  %140 = vmatprep.subr.mxu0 0.0
  %141 = vmatpush2.msra.mxu0 %v49
  %142 = vmatprep.subr.mxu0 0.0
  %143 = vmatpush2.msra.mxu0 %v48
  %144 = vmatprep.mubr.f32.mxu0 %v27
  %145 = vmatmul.mubr.f32.gmra.mxu0 %v26
  %v146 = vpop.f32.mrf.mxu0
  %v147 = vadd.f32 0.0, %v146
  %v148 = vpop.f32.mrf.mxu0
  %149 = vmatprep.mubr.f32.mxu0 %v30
  %150 = vmatmul.mubr.f32.gmra.mxu0 %v29
  %v151 = vpop.f32.mrf.mxu0
  %v152 = vadd.f32 0.0, %v151
  %v153 = vpop.f32.mrf.mxu0
  %154 = vdwg.mxu0
  %155 = vmatprep.subr.mxu0 0.0
  %156 = vmatpush1.msra.mxu0 %v79
  %157 = vmatprep.subr.mxu0 0.0
  %158 = vmatpush1.msra.mxu0 %v78
  %159 = vmatprep.subr.mxu0 0.0
  %160 = vmatpush1.msra.mxu0 %v77
  %161 = vmatprep.subr.mxu0 0.0
  %162 = vmatpush1.msra.mxu0 %v76
  %163 = vmatprep.subr.mxu0 0.0
  %164 = vmatpush1.msra.mxu0 %v75
  %165 = vmatprep.subr.mxu0 0.0
  %166 = vmatpush1.msra.mxu0 %v74
  %167 = vmatprep.subr.mxu0 0.0
  %168 = vmatpush1.msra.mxu0 %v73
  %169 = vmatprep.subr.mxu0 0.0
  %170 = vmatpush1.msra.mxu0 %v72
  %171 = vmatprep.subr.mxu0 0.0
  %172 = vmatpush1.msra.mxu0 %v71
  %173 = vmatprep.subr.mxu0 0.0
  %174 = vmatpush1.msra.mxu0 %v70
  %175 = vmatprep.subr.mxu0 0.0
  %176 = vmatpush1.msra.mxu0 %v69
  %177 = vmatprep.subr.mxu0 0.0
  %178 = vmatpush1.msra.mxu0 %v68
  %179 = vmatprep.subr.mxu0 0.0
  %180 = vmatpush1.msra.mxu0 %v67
  %181 = vmatprep.subr.mxu0 0.0
  %182 = vmatpush1.msra.mxu0 %v66
  %183 = vmatprep.subr.mxu0 0.0
  %184 = vmatpush1.msra.mxu0 %v65
  %185 = vmatprep.subr.mxu0 0.0
  %186 = vmatpush1.msra.mxu0 %v64
  %187 = vmatprep.subr.mxu0 0.0
  %188 = vmatpush2.msra.mxu0 0.0
  %189 = vmatprep.subr.mxu0 0.0
  %190 = vmatpush2.msra.mxu0 0.0
  %191 = vmatprep.subr.mxu0 0.0
  %192 = vmatpush2.msra.mxu0 0.0
  %193 = vmatprep.subr.mxu0 0.0
  %194 = vmatpush2.msra.mxu0 0.0
  %195 = vmatprep.subr.mxu0 0.0
  %196 = vmatpush2.msra.mxu0 0.0
  %197 = vmatprep.subr.mxu0 0.0
  %198 = vmatpush2.msra.mxu0 0.0
  %199 = vmatprep.subr.mxu0 0.0
  %200 = vmatpush2.msra.mxu0 0.0
  %201 = vmatprep.subr.mxu0 0.0
  %202 = vmatpush2.msra.mxu0 0.0
  %203 = vmatprep.subr.mxu0 0.0
  %204 = vmatpush2.msra.mxu0 0.0
  %205 = vmatprep.subr.mxu0 0.0
  %206 = vmatpush2.msra.mxu0 0.0
  %207 = vmatprep.subr.mxu0 0.0
  %208 = vmatpush2.msra.mxu0 0.0
  %209 = vmatprep.subr.mxu0 0.0
  %210 = vmatpush2.msra.mxu0 0.0
  %211 = vmatprep.subr.mxu0 0.0
  %212 = vmatpush2.msra.mxu0 0.0
  %213 = vmatprep.subr.mxu0 0.0
  %214 = vmatpush2.msra.mxu0 0.0
  %215 = vmatprep.subr.mxu0 0.0
  %216 = vmatpush2.msra.mxu0 0.0
  %217 = vmatprep.subr.mxu0 0.0
  %218 = vmatpush2.msra.mxu0 0.0
  %219 = vmatprep.mubr.f32.mxu0 0.0
  %220 = vmatmul.mubr.f32.gmra.mxu0 %v28
  %v221 = vpop.f32.mrf.mxu0
  %v222 = vadd.f32 %v147, %v221
  %v223 = vpop.f32.mrf.mxu0
  %224 = vmatprep.mubr.f32.mxu0 0.0
  %225 = vmatmul.mubr.f32.gmra.mxu0 %v31
  %v226 = vpop.f32.mrf.mxu0
  %v227 = vadd.f32 %v152, %v226
  %v228 = vpop.f32.mrf.mxu0
  %229 = vdwg.mxu0
  %230 = vst [vmem:[%s3] sm:$0xff] %v222
  %231 = vst [vmem:[%s3 + $0x8] sm:$0xff] %v227
  %s232 = smul.u32 0, 16
  %v233 = vlaneseq
  %v234 = vshrl.u32 %v233, 7
  %v235 = vadd.s32 %v234, 8
  %v236 = vstv %s232
  %v237 = vadd.s32 %v236, %v234
  %v238 = vadd.s32 %v236, %v235
  %vm239 = vcmp.lt.s32.totalorder %v237, 16
  %vm240 = vcmp.lt.s32.totalorder %v238, 16
  %v241 = vsel %vm239, 1, 0
  %v242 = vsel %vm240, 1, 0
  %v243 = vcvt.s32.f32 %v241
  %v244 = vcvt.s32.f32 %v242
  %s245 = ssub.s32 16, %s232
  %p246 = scmp.lt.s32.totalorder %s245, 16
  %s247 = scalar_select %p246, %s245, 16
  %s248 = scvt.s32.f32 %s247
  %p249 = scmp.lt.s32.totalorder %s232, 16
  %s250 = scalar_select %p249, %s232, 16
  %s251 = scvt.s32.f32 %s250
  %v252 = vmul.f32 %v222, %v243
  %v253 = vmul.f32 %v227, %v244
  %v254 = vadd.f32 %v252, %v253
  %v255 = vrot.slane %v254, 4
  %v256 = vadd.f32 %v254, %v255
  %v257 = vrot.slane %v256, 2
  %v258 = vadd.f32 %v256, %v257
  %v259 = vrot.slane %v258, 1
  %v260 = vadd.f32 %v258, %v259
  %v261 = vstv %s248
  %v262 = vrcp.pop %v261
  %s263 = vtos %v262
  %v264 = vstv %s263
  %v265 = vmul.f32 %v260, %v264
  %v266 = vsub.f32 %v222, %v265
  %v267 = vsub.f32 %v227, %v265
  %v268 = vmul.f32 %v266, %v243
  %v269 = vmul.f32 %v267, %v244
  %v270 = vmul.f32 %v268, %v268
  %v271 = vmul.f32 %v269, %v269
  %v272 = vadd.f32 %v270, %v271
  %v273 = vrot.slane %v272, 4
  %v274 = vadd.f32 %v272, %v273
  %v275 = vrot.slane %v274, 2
  %v276 = vadd.f32 %v274, %v275
  %v277 = vrot.slane %v276, 1
  %v278 = vadd.f32 %v276, %v277
  %s279 = sadd.f32 %s251, %s248
  %v280 = vld [vmem:[#allocation2] sm:$0x1]
  %v281 = vsub.f32 %v265, %v280
  %v282 = vstv %s279
  %v283 = vrcp.pop %v282
  %s284 = vtos %v283
  %s285 = smul.f32 %s248, %s284
  %v286 = vstv %s285
  %v287 = vmul.f32 %v281, %v286
  %v288 = vadd.f32 %v280, %v287
  %289 = vst [vmem:[#allocation2] sm:$0x1] %v288
  %v290 = vld [vmem:[#allocation3] sm:$0x1]
  %v291 = vadd.f32 %v290, %v278
  %v292 = vmul.f32 %v281, %v281
  %s293 = smul.f32 %s251, %s248
  %v294 = vstv %s279
  %v295 = vrcp.pop %v294
  %s296 = vtos %v295
  %s297 = smul.f32 %s293, %s296
  %v298 = vstv %s297
  %v299 = vmul.f32 %v292, %v298
  %v300 = vadd.f32 %v291, %v299
  %301 = vst [vmem:[#allocation3] sm:$0x1] %v300
  %v302 = vld [vmem:[%s2] sm:$0xff]
  %v303 = vld [vmem:[%s2 + $0x8] sm:$0xff]
  %v304 = vld [vmem:[%s2 + $0x10] sm:$0xff]
  %v305 = vld [vmem:[%s2 + $0x18] sm:$0xff]
  %v306 = vld [vmem:[%s2 + $0x20] sm:$0xff]
  %v307 = vld [vmem:[%s2 + $0x28] sm:$0xff]
  %v308 = vld [vmem:[%s2 + $0x30] sm:$0xff]
  %v309 = vld [vmem:[%s2 + $0x38] sm:$0xff]
  %v310 = vld [vmem:[%s2 + $0x40] sm:$0xff]
  %v311 = vld [vmem:[%s2 + $0x48] sm:$0xff]
  %v312 = vld [vmem:[%s2 + $0x50] sm:$0xff]
  %v313 = vld [vmem:[%s2 + $0x58] sm:$0xff]
  %v314 = vld [vmem:[%s2 + $0x60] sm:$0xff]
  %v315 = vld [vmem:[%s2 + $0x68] sm:$0xff]
  %v316 = vld [vmem:[%s2 + $0x70] sm:$0xff]
  %v317 = vld [vmem:[%s2 + $0x78] sm:$0xff]
  %318 = vmatprep.subr.mxu0 0.0
  %319 = vmatpush1.msra.mxu0 %v317
  %320 = vmatprep.subr.mxu0 0.0
  %321 = vmatpush1.msra.mxu0 %v316
  %322 = vmatprep.subr.mxu0 0.0
  %323 = vmatpush1.msra.mxu0 %v315
  %324 = vmatprep.subr.mxu0 0.0
  %325 = vmatpush1.msra.mxu0 %v314
  %326 = vmatprep.subr.mxu0 0.0
  %327 = vmatpush1.msra.mxu0 %v313
  %328 = vmatprep.subr.mxu0 0.0
  %329 = vmatpush1.msra.mxu0 %v312
  %330 = vmatprep.subr.mxu0 0.0
  %331 = vmatpush1.msra.mxu0 %v311
  %332 = vmatprep.subr.mxu0 0.0
  %333 = vmatpush1.msra.mxu0 %v310
  %334 = vmatprep.subr.mxu0 0.0
  %335 = vmatpush1.msra.mxu0 %v309
  %336 = vmatprep.subr.mxu0 0.0
  %337 = vmatpush1.msra.mxu0 %v308
  %338 = vmatprep.subr.mxu0 0.0
  %339 = vmatpush1.msra.mxu0 %v307
  %340 = vmatprep.subr.mxu0 0.0
  %341 = vmatpush1.msra.mxu0 %v306
  %342 = vmatprep.subr.mxu0 0.0
  %343 = vmatpush1.msra.mxu0 %v305
  %344 = vmatprep.subr.mxu0 0.0
  %345 = vmatpush1.msra.mxu0 %v304
  %346 = vmatprep.subr.mxu0 0.0
  %347 = vmatpush1.msra.mxu0 %v303
  %348 = vmatprep.subr.mxu0 0.0
  %349 = vmatpush1.msra.mxu0 %v302
  %350 = vmatprep.subr.mxu0 0.0
  %351 = vmatpush2.msra.mxu0 0.0
  %352 = vmatprep.subr.mxu0 0.0
  %353 = vmatpush2.msra.mxu0 0.0
  %354 = vmatprep.subr.mxu0 0.0
  %355 = vmatpush2.msra.mxu0 0.0
  %356 = vmatprep.subr.mxu0 0.0
  %357 = vmatpush2.msra.mxu0 0.0
  %358 = vmatprep.subr.mxu0 0.0
  %359 = vmatpush2.msra.mxu0 0.0
  %360 = vmatprep.subr.mxu0 0.0
  %361 = vmatpush2.msra.mxu0 0.0
  %362 = vmatprep.subr.mxu0 0.0
  %363 = vmatpush2.msra.mxu0 0.0
  %364 = vmatprep.subr.mxu0 0.0
  %365 = vmatpush2.msra.mxu0 0.0
  %366 = vmatprep.subr.mxu0 0.0
  %367 = vmatpush2.msra.mxu0 0.0
  %368 = vmatprep.subr.mxu0 0.0
  %369 = vmatpush2.msra.mxu0 0.0
  %370 = vmatprep.subr.mxu0 0.0
  %371 = vmatpush2.msra.mxu0 0.0
  %372 = vmatprep.subr.mxu0 0.0
  %373 = vmatpush2.msra.mxu0 0.0
  %374 = vmatprep.subr.mxu0 0.0
  %375 = vmatpush2.msra.mxu0 0.0
  %376 = vmatprep.subr.mxu0 0.0
  %377 = vmatpush2.msra.mxu0 0.0
  %378 = vmatprep.subr.mxu0 0.0
  %379 = vmatpush2.msra.mxu0 0.0
  %380 = vmatprep.subr.mxu0 0.0
  %381 = vmatpush2.msra.mxu0 0.0
  %382 = vmatprep.mubr.f32.mxu0 0.0
  %383 = vmatmul.mubr.f32.gmra.mxu0 %v27
  %v384 = vpop.f32.mrf.mxu0
  %v385 = vadd.f32 0.0, %v384
  %v386 = vpop.f32.mrf.mxu0
  %387 = vmatprep.mubr.f32.mxu0 0.0
  %388 = vmatmul.mubr.f32.gmra.mxu0 %v30
  %v389 = vpop.f32.mrf.mxu0
  %v390 = vadd.f32 0.0, %v389
  %v391 = vpop.f32.mrf.mxu0
  %392 = vdwg.mxu0
  %393 = vst [vmem:[%s4] sm:$0xff] %v385
  %394 = vst [vmem:[%s4 + $0x8] sm:$0xff] %v390
  %v395 = vmul.f32 %v385, %v243
  %v396 = vmul.f32 %v390, %v244
  %v397 = vadd.f32 %v395, %v396
  %v398 = vrot.slane %v397, 4
  %v399 = vadd.f32 %v397, %v398
  %v400 = vrot.slane %v399, 2
  %v401 = vadd.f32 %v399, %v400
  %v402 = vrot.slane %v401, 1
  %v403 = vadd.f32 %v401, %v402
  %v404 = vmul.f32 %v403, %v264
  %v405 = vsub.f32 %v385, %v404
  %v406 = vsub.f32 %v390, %v404
  %v407 = vmul.f32 %v405, %v243
  %v408 = vmul.f32 %v406, %v244
  %v409 = vmul.f32 %v407, %v407
  %v410 = vmul.f32 %v408, %v408
  %v411 = vadd.f32 %v409, %v410
  %v412 = vrot.slane %v411, 4
  %v413 = vadd.f32 %v411, %v412
  %v414 = vrot.slane %v413, 2
  %v415 = vadd.f32 %v413, %v414
  %v416 = vrot.slane %v415, 1
  %v417 = vadd.f32 %v415, %v416
  %v418 = vld [vmem:[#allocation4] sm:$0x1]
  %v419 = vsub.f32 %v404, %v418
  %v420 = vmul.f32 %v419, %v286
  %v421 = vadd.f32 %v418, %v420
  %422 = vst [vmem:[#allocation4] sm:$0x1] %v421
  %v423 = vld [vmem:[#allocation5] sm:$0x1]
  %v424 = vadd.f32 %v423, %v417
  %v425 = vmul.f32 %v419, %v419
  %v426 = vmul.f32 %v425, %v298
  %v427 = vadd.f32 %v424, %v426
  %428 = vst [vmem:[#allocation5] sm:$0x1] %v427
  // Predicated region
  $region18: #{basic_block_forward.3} parent=0 // pred_check
    %p429 = pneg %p18
  $region19: #{basic_block_forward.3} parent=0 // pred_check_branch
    %431 = sbr.rel (%p429) target = $region21
  $region20: #{basic_block_forward.3} parent=0 // pred_region
    %v432 = vld [vmem:[#allocation2] sm:$0x1]
    %433 = vst [vmem:[%s5] sm:$0x1] %v432
    %v434 = vld [vmem:[#allocation3] sm:$0x1]
    %v435 = vmul.f32 %v434, 0.0625
    %436 = vst [vmem:[%s5 + $0x1] sm:$0x1] %v435
    %v437 = vld [vmem:[#allocation4] sm:$0x1]
    %438 = vst [vmem:[%s6] sm:$0x1] %v437
    %v439 = vld [vmem:[#allocation5] sm:$0x1]
    %v440 = vmul.f32 %v439, 0.0625
    %441 = vst [vmem:[%s6 + $0x1] sm:$0x1] %v440
  $region21: #{basic_block_forward.3} parent=0 // pred_fallthru
    _
  // Predicated region
  $region22: #{basic_block_forward.3} parent=0 // pred_check
    _
  $region23: #{basic_block_forward.3} parent=0 // pred_check_branch
    %443 = sbr.rel (0) target = $region25
  $region24: #{basic_block_forward.3} parent=0 // pred_region
    _
  $region25: #{basic_block_forward.3} parent=0 // pred_fallthru
    _
  // Predicated region
  $region26: #{basic_block_forward.3} parent=0 // pred_check
    _
  $region27: #{basic_block_forward.3} parent=0 // pred_check_branch
    %445 = sbr.rel (0) target = $region29
  $region28: #{basic_block_forward.3} parent=0 // pred_region
    _
  $region29: #{basic_block_forward.3} parent=0 // pred_fallthru
    _
  // Predicated region
  $region30: #{basic_block_forward.3} parent=0 // pred_check
    _
  $region31: #{basic_block_forward.3} parent=0 // pred_check_branch
    %447 = sbr.rel (0) target = $region33
  $region32: #{basic_block_forward.3} parent=0 // pred_region
    _
  $region33: #{basic_block_forward.3} parent=0 // pred_fallthru
    _
  // Predicated region
  $region34: #{basic_block_forward.3} parent=0 // pred_check
    _
  $region35: #{basic_block_forward.3} parent=0 // pred_check_branch
    %449 = sbr.rel (0) target = $region37
  $region36: #{basic_block_forward.3} parent=0 // pred_region
    _
  $region37: #{basic_block_forward.3} parent=0 // pred_fallthru
    _
  // Predicated region
  $region38: #{basic_block_forward.3} parent=0 // pred_check
    _
  $region39: #{basic_block_forward.3} parent=0 // pred_check_branch
    %451 = sbr.rel (0) target = $region41
  $region40: #{basic_block_forward.3} parent=0 // pred_region
    _
  $region41: #{basic_block_forward.3} parent=0 // pred_fallthru
    _
  // Predicated region
  $region42: #{basic_block_forward.3} parent=0 // pred_check
    _
  $region43: #{basic_block_forward.3} parent=0 // pred_check_branch
    %453 = sbr.rel (0) target = $region45
  $region44: #{basic_block_forward.3} parent=0 // pred_region
    _
  $region45: #{basic_block_forward.3} parent=0 // pred_fallthru
    _
  // Predicated region
  $region46: #{basic_block_forward.3} parent=0 // pred_check
    _
  $region47: #{basic_block_forward.3} parent=0 // pred_check_branch
    %455 = sbr.rel (0) target = $region49
  $region48: #{basic_block_forward.3} parent=0 // pred_region
    _
  $region49: #{basic_block_forward.3} parent=0 // pred_fallthru
    _
  // Predicated region
  $region50: #{basic_block_forward.3} parent=0 // pred_check
    _
  $region51: #{basic_block_forward.3} parent=0 // pred_check_branch
    %457 = sbr.rel (0) target = $region53
  $region52: #{basic_block_forward.3} parent=0 // pred_region
    _
  $region53: #{basic_block_forward.3} parent=0 // pred_fallthru
    _

</llo_original>
